<compile_context>
chip_gen: v6e
topology: v6e:2x2x1
jax: 0.10.0
libtpu: 0.0.40
codegen_flags: <defaults>
</compile_context>

<pallas_src>
import functools

import jax
import jax.numpy as jnp
import numpy as np
from jax.experimental import pallas as pl
from jax.experimental.pallas import tpu as pltpu


# ----------------------------- Pallas kernels -----------------------------

def _matmul_bias_kernel(a_ref, b_ref, bias_ref, o_ref, acc_ref, *, leaky):
    """Tiled (TM,TK)@(TK,TN) with K-axis accumulation; bias (+LeakyReLU) fused."""
    k = pl.program_id(2)

    @pl.when(k == 0)
    def _():
        acc_ref[...] = jnp.zeros_like(acc_ref)

    acc_ref[...] += jnp.dot(a_ref[...], b_ref[...],
                            preferred_element_type=jnp.float32)

    @pl.when(k == pl.num_programs(2) - 1)
    def _():
        y = acc_ref[...] + bias_ref[...]
        if leaky:
            y = jnp.where(y >= 0, y, 0.2 * y)          # LeakyReLU(0.2)
        o_ref[...] = y.astype(o_ref.dtype)


def _conv_stats_kernel(a_ref, b_ref, o_ref, sum_ref, sq_ref, acc_ref):
    """Per-sample conv matmul, HW tiled; per-channel sum / sum-of-squares
    accumulated (in f32, from the f32 accumulator) across the HW grid axis."""
    h = pl.program_id(2)
    k = pl.program_id(3)

    @pl.when(jnp.logical_and(h == 0, k == 0))
    def _():
        sum_ref[...] = jnp.zeros_like(sum_ref)
        sq_ref[...] = jnp.zeros_like(sq_ref)

    @pl.when(k == 0)
    def _():
        acc_ref[...] = jnp.zeros_like(acc_ref)

    acc_ref[...] += jnp.dot(a_ref[0], b_ref[...],
                            preferred_element_type=jnp.float32)

    @pl.when(k == pl.num_programs(3) - 1)
    def _():
        y = acc_ref[...]                                 # (THW, TN) f32
        o_ref[...] = y[None].astype(o_ref.dtype)
        # Padded HW rows are exact zeros (zero patches, no bias) -> they
        # contribute nothing to the statistics.
        sum_ref[...] += jnp.sum(y, axis=0, keepdims=True)[None]
        sq_ref[...] += jnp.sum(y * y, axis=0, keepdims=True)[None]


def _in_leaky_kernel(x_ref, sum_ref, sq_ref, o_ref, *, inv_hw, eps):
    """InstanceNorm2d(eps, affine=False) + LeakyReLU(0.2) from saved stats."""
    x = x_ref[...].astype(jnp.float32)                   # (1, THW, TN)
    mean = sum_ref[...] * inv_hw                         # (1, 1, TN)
    var = jnp.maximum(sq_ref[...] * inv_hw - mean * mean, 0.0)
    yn = (x - mean) * jax.lax.rsqrt(var + eps)
    o_ref[...] = jnp.where(yn >= 0, yn, 0.2 * yn).astype(o_ref.dtype)


# ------------------------------ glue (JAX) --------------------------------

def _round_up(x, m):
    return ((x + m - 1) // m) * m


def _pad_axis(x, axis, target):
    extra = target - x.shape[axis]
    if extra == 0:
        return x
    cfg = [(0, 0)] * x.ndim
    cfg[axis] = (0, extra)
    return jnp.pad(x, cfg)


@functools.lru_cache(maxsize=1)
def _wide_mxu():
    """True on 256-wide-MXU generations (v6e / v7x); False on v5 and older."""
    try:
        kind = jax.devices()[0].device_kind.lower()
    except Exception:
        return True
    return not any(t in kind for t in ("v2", "v3", "v4", "v5"))


def _im2col(x_nhwc, k, stride, pad):
    """-> patches (N, OH*OW, K*K*Cin) with (kh, kw, cin) inner ordering."""
    x = jnp.pad(x_nhwc, ((0, 0), (pad, pad), (pad, pad), (0, 0)))
    n, hp, wp, c = x.shape
    oh = (hp - k) // stride + 1
    ow = (wp - k) // stride + 1
    cols = []
    for i in range(k):
        for j in range(k):
            cols.append(x[:, i:i + stride * oh:stride, j:j + stride * ow:stride, :])
    patches = jnp.stack(cols, axis=-2)                  # (N, OH, OW, K*K, C)
    return patches.reshape(n, oh * ow, k * k * c), (n, oh, ow)


def _weight_matrix(w_oihw, kp, coutp, compute_dtype):
    kk = w_oihw.shape[1] * w_oihw.shape[2] * w_oihw.shape[3]
    cout = w_oihw.shape[0]
    # (Cout, Cin, KH, KW) -> (KH, KW, Cin, Cout) -> (K, Cout): matches im2col.
    w2 = jnp.transpose(w_oihw, (2, 3, 1, 0)).reshape(kk, cout)
    return _pad_axis(_pad_axis(w2, 0, kp), 1, coutp).astype(compute_dtype)


def _pick_k_tiles(kk, target=2048):
    tk = kk if kk <= target else target
    return tk, _round_up(kk, tk)


def _pick_n_tiles(cout):
    coutp = _round_up(cout, 128)
    tn = 256 if (coutp % 256 == 0 and _wide_mxu()) else 128
    return tn, coutp


def _conv_pallas(x_nhwc, w_oihw, bias, stride, pad, leaky, compute_dtype,
                 out_dtype):
    """Conv2d (+ optional LeakyReLU) as a tiled M/N/K Pallas matmul."""
    ksz = w_oihw.shape[-1]
    cout = w_oihw.shape[0]
    x = x_nhwc.astype(compute_dtype)                    # cast BEFORE im2col
    patches, (n, oh, ow) = _im2col(x, ksz, stride, pad)
    kk = patches.shape[-1]
    m = n * oh * ow

    tk, kp = _pick_k_tiles(kk)
    tn, coutp = _pick_n_tiles(cout)
    tm = min(1024 if kk <= 512 else 512, _round_up(m, 8))
    mp = _round_up(m, tm)

    a = patches.reshape(m, kk)
    if kp != kk:
        a = _pad_axis(a, 1, kp)
    if mp != m:
        a = _pad_axis(a, 0, mp)
    w2 = _weight_matrix(w_oihw, kp, coutp, compute_dtype)
    b2 = _pad_axis(bias.reshape(1, cout), 1, coutp).astype(jnp.float32)

    grid = (mp // tm, coutp // tn, kp // tk)
    out = pl.pallas_call(
        functools.partial(_matmul_bias_kernel, leaky=leaky),
        out_shape=jax.ShapeDtypeStruct((mp, coutp), out_dtype),
        grid=grid,
        in_specs=[
            pl.BlockSpec((tm, tk), lambda i, j, k: (i, k)),
            pl.BlockSpec((tk, tn), lambda i, j, k: (k, j)),
            pl.BlockSpec((1, tn), lambda i, j, k: (0, j)),
        ],
        out_specs=pl.BlockSpec((tm, tn), lambda i, j, k: (i, j)),
        scratch_shapes=[pltpu.VMEM((tm, tn), jnp.float32)],
        compiler_params=pltpu.CompilerParams(
            dimension_semantics=("parallel", "parallel", "arbitrary")),
    )(a, w2, b2)
    return out[:m, :cout].reshape(n, oh, ow, cout)


def _conv_in_leaky_pallas(x_nhwc, w_oihw, stride, pad, compute_dtype):
    """Conv2d + InstanceNorm2d + LeakyReLU as two Pallas passes:
       (1) HW-tiled conv matmul with fused per-channel sum / sum-of-squares,
       (2) lightweight normalize + LeakyReLU using the saved statistics.
    The conv bias is dropped: InstanceNorm's mean subtraction cancels it."""
    ksz = w_oihw.shape[-1]
    cout = w_oihw.shape[0]
    x = x_nhwc.astype(compute_dtype)
    patches, (n, oh, ow) = _im2col(x, ksz, stride, pad)  # (N, HW, K)
    hw = oh * ow
    kk = patches.shape[-1]

    tk, kp = _pick_k_tiles(kk)
    tn, coutp = _pick_n_tiles(cout)
    thw = min(256, _round_up(hw, 8))
    hwp = _round_up(hw, thw)

    a = patches
    if kp != kk:
        a = _pad_axis(a, 2, kp)
    if hwp != hw:
        a = _pad_axis(a, 1, hwp)
    w2 = _weight_matrix(w_oihw, kp, coutp, compute_dtype)

    # Pass 1: conv + per-(sample, channel) sum / sumsq.
    grid = (n, coutp // tn, hwp // thw, kp // tk)
    conv_out, s1, s2 = pl.pallas_call(
        _conv_stats_kernel,
        out_shape=(
            jax.ShapeDtypeStruct((n, hwp, coutp), compute_dtype),
            jax.ShapeDtypeStruct((n, 1, coutp), jnp.float32),
            jax.ShapeDtypeStruct((n, 1, coutp), jnp.float32),
        ),
        grid=grid,
        in_specs=[
            pl.BlockSpec((1, thw, tk), lambda i, j, h, k: (i, h, k)),
            pl.BlockSpec((tk, tn), lambda i, j, h, k: (k, j)),
        ],
        out_specs=(
            pl.BlockSpec((1, thw, tn), lambda i, j, h, k: (i, h, j)),
            pl.BlockSpec((1, 1, tn), lambda i, j, h, k: (i, 0, j)),
            pl.BlockSpec((1, 1, tn), lambda i, j, h, k: (i, 0, j)),
        ),
        scratch_shapes=[pltpu.VMEM((thw, tn), jnp.float32)],
        compiler_params=pltpu.CompilerParams(
            dimension_semantics=("parallel", "parallel", "arbitrary",
                                 "arbitrary")),
    )(a, w2)

    # Pass 2: normalize + LeakyReLU (all axes parallel).
    grid2 = (n, coutp // tn, hwp // thw)
    out = pl.pallas_call(
        functools.partial(_in_leaky_kernel, inv_hw=1.0 / hw, eps=1e-5),
        out_shape=jax.ShapeDtypeStruct((n, hwp, coutp), compute_dtype),
        grid=grid2,
        in_specs=[
            pl.BlockSpec((1, thw, tn), lambda i, j, h: (i, h, j)),
            pl.BlockSpec((1, 1, tn), lambda i, j, h: (i, 0, j)),
            pl.BlockSpec((1, 1, tn), lambda i, j, h: (i, 0, j)),
        ],
        out_specs=pl.BlockSpec((1, thw, tn), lambda i, j, h: (i, h, j)),
        compiler_params=pltpu.CompilerParams(
            dimension_semantics=("parallel", "parallel", "parallel")),
    )(conv_out, s1, s2)

    return out[:, :hw, :cout].reshape(n, oh, ow, cout)


# ------------------------------ parameters --------------------------------

def init_params(key):
    # conv layers: (Cout, Cin), all kernels 4x4.
    specs = [(64, 3), (128, 64), (256, 128), (512, 256), (1, 512)]
    params = []
    for i, (cout, cin) in enumerate(specs):
        kw, kb = jax.random.split(jax.random.fold_in(key, i))
        bound = 1.0 / np.sqrt(cin * 4 * 4)      # PyTorch-style uniform bound
        w = jax.random.uniform(kw, (cout, cin, 4, 4), jnp.float32, -bound, bound)
        b = jax.random.uniform(kb, (cout,), jnp.float32, -bound, bound)
        params.append((w, b))
    return params


# ------------------------------- forward ----------------------------------

def discriminator_forward(x_nchw, params, compute_dtype=jnp.bfloat16):
    x = jnp.transpose(x_nchw, (0, 2, 3, 1)).astype(jnp.float32)   # NHWC
    # conv1: Conv(3->64, s=2) + LeakyReLU(0.2); bf16 intermediate.
    x = _conv_pallas(x, params[0][0], params[0][1], 2, 1,
                     leaky=True, compute_dtype=compute_dtype,
                     out_dtype=compute_dtype)
    # conv2..conv4: Conv(s=2) + InstanceNorm2d + LeakyReLU(0.2), HW-tiled.
    for idx in (1, 2, 3):
        x = _conv_in_leaky_pallas(x, params[idx][0], 2, 1,
                                  compute_dtype=compute_dtype)
    # conv5: Conv(512->1, s=1), no activation; final output in f32.
    x = _conv_pallas(x, params[4][0], params[4][1], 1, 1,
                     leaky=False, compute_dtype=compute_dtype,
                     out_dtype=jnp.float32)
    return jnp.transpose(x, (0, 3, 1, 2))                          # NCHW


# -------------------------- pure-JAX reference -----------------------------

def _ref_conv(x_nchw, w, b, stride, pad):
    out = jax.lax.conv_general_dilated(
        x_nchw, w, (stride, stride), [(pad, pad), (pad, pad)],
        dimension_numbers=("NCHW", "OIHW", "NCHW"))
    return out + b.reshape(1, -1, 1, 1)


def _leaky(x):
    return jnp.where(x >= 0, x, 0.2 * x)


def _ref_instnorm(x):
    mean = jnp.mean(x, axis=(2, 3), keepdims=True)
    var = jnp.mean((x - mean) ** 2, axis=(2, 3), keepdims=True)
    return (x - mean) / jnp.sqrt(var + 1e-5)


def discriminator_ref(x, params):
    x = _leaky(_ref_conv(x, params[0][0], params[0][1], 2, 1))
    for idx in (1, 2, 3):
        x = _leaky(_ref_instnorm(_ref_conv(x, params[idx][0], params[idx][1], 2, 1)))
    return _ref_conv(x, params[4][0], params[4][1], 1, 1)


# --------------------------------- main ------------------------------------

if __name__ == "__main__":
    key = jax.random.PRNGKey(0)
    kx, kp = jax.random.split(key)
    # Minimum spatial size for this stack is 32 (conv5 needs >=2x2 input).
    x = jax.random.normal(kx, (2, 3, 32, 32), jnp.float32)
    params = init_params(kp)

    ref = discriminator_ref(x, params)

    # 1) Structural exactness: run the kernels with f32 MXU / memory path.
    out_f32 = jax.block_until_ready(
        discriminator_forward(x, params, compute_dtype=jnp.float32))
    assert out_f32.shape == (2, 1, 1, 1), out_f32.shape
    np.testing.assert_allclose(np.asarray(out_f32), np.asarray(ref),
                               rtol=2e-3, atol=2e-3)

    # 2) Fast path: bf16 MXU inputs + bf16 intermediates, f32 accum / stats.
    out_bf16 = jax.block_until_ready(
        discriminator_forward(x, params, compute_dtype=jnp.bfloat16))
    assert out_bf16.shape == (2, 1, 1, 1), out_bf16.shape
    np.testing.assert_allclose(np.asarray(out_bf16), np.asarray(ref),
                               rtol=5e-2, atol=5e-2)

    print("KERNEL_OK")
</pallas_src>

<mosaic_0001>
module attributes {stable_mosaic.version = 11 : i64} {
  func.func @_matmul_bias_kernel(%arg0: i32, %arg1: i32, %arg2: i32, %arg3: memref<512x48xf32, #tpu.memory_space<vmem>>, %arg4: memref<48x128xf32, #tpu.memory_space<vmem>>, %arg5: memref<1x128xf32, #tpu.memory_space<vmem>>, %arg6: memref<512x128xf32, #tpu.memory_space<vmem>>, %arg7: memref<512x128xf32, #tpu.memory_space<vmem>>) attributes {dimension_semantics = [#tpu.dimension_semantics<parallel>, #tpu.dimension_semantics<parallel>, #tpu.dimension_semantics<arbitrary>], iteration_bounds = array<i64: 1, 1, 1>, scalar_prefetch = 0 : i64, scratch_operands = 1 : i64, tpu.core_type = #tpu.core_type<tc>, window_params = [{transform_indices = @transform_0, window_bounds = array<i64: 512, 48>}, {transform_indices = @transform_1, window_bounds = array<i64: 48, 128>}, {transform_indices = @transform_2, window_bounds = array<i64: 1, 128>}, {transform_indices = @transform_3, window_bounds = array<i64: 512, 128>}]} {
    %c0_i32 = arith.constant 0 : i32
    %0 = arith.cmpi eq, %arg2, %c0_i32 : i32
    %1 = arith.extui %0 : i1 to i32
    %c0_i32_0 = arith.constant 0 : i32
    %2 = arith.cmpi ne, %1, %c0_i32_0 : i32
    scf.if %2 {
      %cst_10 = arith.constant 0.000000e+00 : f32
      %12 = vector.broadcast %cst_10 : f32 to vector<512x128xf32>
      %c0_11 = arith.constant 0 : index
      %c0_12 = arith.constant 0 : index
      %13 = vector.load %arg7[%c0_11, %c0_12] : memref<512x128xf32, #tpu.memory_space<vmem>>, vector<512x128xf32>
      tpu.vector_store %arg7[%c0_11, %c0_12], %12 {strides = array<i32>} : memref<512x128xf32, #tpu.memory_space<vmem>>, vector<512x128xf32>,
    } else {
    }
    %c0 = arith.constant 0 : index
    %c0_1 = arith.constant 0 : index
    %3 = vector.load %arg7[%c0, %c0_1] : memref<512x128xf32, #tpu.memory_space<vmem>>, vector<512x128xf32>
    %c0_2 = arith.constant 0 : index
    %c0_3 = arith.constant 0 : index
    %4 = vector.load %arg3[%c0_2, %c0_3] : memref<512x48xf32, #tpu.memory_space<vmem>>, vector<512x48xf32>
    %c0_4 = arith.constant 0 : index
    %c0_5 = arith.constant 0 : index
    %5 = vector.load %arg4[%c0_4, %c0_5] : memref<48x128xf32, #tpu.memory_space<vmem>>, vector<48x128xf32>
    %cst = arith.constant dense<0.000000e+00> : vector<512x128xf32>
    %6 = tpu.matmul %4, %5, %cst {dimension_numbers = #tpu.dot_dimension_numbers<[1], [0], [0], [1], [0, 0, 1, 1], [], []>} : vector<512x48xf32>, vector<48x128xf32>, vector<512x128xf32> -> vector<512x128xf32>
    %7 = arith.addf %3, %6 : vector<512x128xf32>
    %c0_6 = arith.constant 0 : index
    %c0_7 = arith.constant 0 : index
    %8 = vector.load %arg7[%c0_6, %c0_7] : memref<512x128xf32, #tpu.memory_space<vmem>>, vector<512x128xf32>
    tpu.vector_store %arg7[%c0_6, %c0_7], %7 {strides = array<i32>} : memref<512x128xf32, #tpu.memory_space<vmem>>, vector<512x128xf32>,
    %c0_i32_8 = arith.constant 0 : i32
    %9 = arith.cmpi eq, %arg2, %c0_i32_8 : i32
    %10 = arith.extui %9 : i1 to i32
    %c0_i32_9 = arith.constant 0 : i32
    %11 = arith.cmpi ne, %10, %c0_i32_9 : i32
    scf.if %11 {
      %c0_10 = arith.constant 0 : index
      %c0_11 = arith.constant 0 : index
      %12 = vector.load %arg7[%c0_10, %c0_11] : memref<512x128xf32, #tpu.memory_space<vmem>>, vector<512x128xf32>
      %c0_12 = arith.constant 0 : index
      %c0_13 = arith.constant 0 : index
      %13 = vector.load %arg5[%c0_12, %c0_13] : memref<1x128xf32, #tpu.memory_space<vmem>>, vector<1x128xf32>
      %14 = vector.broadcast %13 : vector<1x128xf32> to vector<512x128xf32>
      %15 = arith.addf %12, %14 : vector<512x128xf32>
      %cst_14 = arith.constant 0.000000e+00 : f32
      %16 = vector.broadcast %cst_14 : f32 to vector<512x128xf32>
      %17 = arith.cmpf oge, %15, %16 : vector<512x128xf32>
      %cst_15 = arith.constant 2.000000e-01 : f32
      %18 = vector.broadcast %cst_15 : f32 to vector<512x128xf32>
      %19 = arith.mulf %18, %15 : vector<512x128xf32>
      %20 = arith.select %17, %15, %19 : vector<512x128xi1>, vector<512x128xf32>
      %c0_16 = arith.constant 0 : index
      %c0_17 = arith.constant 0 : index
      %21 = vector.load %arg6[%c0_16, %c0_17] : memref<512x128xf32, #tpu.memory_space<vmem>>, vector<512x128xf32>
      tpu.vector_store %arg6[%c0_16, %c0_17], %20 {strides = array<i32>} : memref<512x128xf32, #tpu.memory_space<vmem>>, vector<512x128xf32>,
    } else {
    }
    return
  }
  func.func @transform_0(%arg0: i32, %arg1: i32, %arg2: i32) -> (i32, i32) {
    %c0_i32 = arith.constant 0 : i32
    return %arg0, %arg2 : i32, i32
  }
  func.func @transform_1(%arg0: i32, %arg1: i32, %arg2: i32) -> (i32, i32) {
    %c0_i32 = arith.constant 0 : i32
    return %arg2, %arg1 : i32, i32
  }
  func.func @transform_2(%arg0: i32, %arg1: i32, %arg2: i32) -> (i32, i32) {
    %c0_i32 = arith.constant 0 : i32
    %c0_i32_0 = arith.constant 0 : i32
    return %c0_i32, %arg1 : i32, i32
  }
  func.func @transform_3(%arg0: i32, %arg1: i32, %arg2: i32) -> (i32, i32) {
    %c0_i32 = arith.constant 0 : i32
    return %arg0, %arg1 : i32, i32
  }
}

</mosaic_0001>

<llo_original>
// kernel: tpu_custom_call.1
$region0: #{tpu_custom_call.1}
  #allocation0 [shape = 'u32[]', space=smem, size = 0x4, offset = 0x4, fixed_abs, tag = 'smem constant byte address 0x4 - core index']
  #allocation1 [shape = 'u32[144,128]{1,0:T(1,128)}', space=vmem, size = 0x12000, scoped, tag = 'internal scratch']
  #allocation2 [shape = 'f32[512,128]{1,0:T(8,128)}', space=vmem, size = 0x40000, scoped, tag = 'scratch operand']
  %s0 = inlined_call_operand.vmem [shape: f32[512,48], index: 0, kind: input, shape index: {}]
  %s1 = inlined_call_operand.vmem [shape: f32[48,128], index: 1, kind: input, shape index: {}]
  %s2 = inlined_call_operand.vmem [shape: f32[1,128], index: 2, kind: input, shape index: {}]
  %s3 = inlined_call_operand.hbm [shape: f32[512,128], index: 3, kind: output, shape index: {}]
  %s4 = sld [smem:[#allocation0]]
  $region30: #{tpu_custom_call.1} parent=0
    _
  %s6 = ssub.s32 1, %s4
  %s7 = scalar_select 0, %s6, %s4
  $region1: #{tpu_custom_call.1} parent=0
    #allocation3 [shape = 'u8[262144]{0}', space=vmem, size = 0x40000, scoped, tag = 'output window, operand 0, single buffered']
    #allocation4 [shape = 's32[1]{0}', space=sflag, size = 0x4, scoped, tag = 'scoped memory for tpu_custom_call.1']
    %8 = vsyncpa [#allocation4], 0
    // Predicated region
    $region2: #{tpu_custom_call.1} parent=1 // pred_check
      _
    $region3: #{tpu_custom_call.1} parent=1 // pred_check_branch
      %10 = sbr.rel (0) target = $region5
    $region4: #{tpu_custom_call.1} parent=1 // pred_region
      _
    $region5: #{tpu_custom_call.1} parent=1 // pred_fallthru
      _
    // Predicated region
    $region6: #{tpu_custom_call.1} parent=1 // pred_check
      _
    $region7: #{tpu_custom_call.1} parent=1 // pred_check_branch
      %12 = sbr.rel (0) target = $region9
    $region8: #{tpu_custom_call.1} parent=1 // pred_region
      _
    $region9: #{tpu_custom_call.1} parent=1 // pred_fallthru
      _
    // Predicated region
    $region10: #{tpu_custom_call.1} parent=1 // pred_check
      _
    $region11: #{tpu_custom_call.1} parent=1 // pred_check_branch
      %14 = sbr.rel (0) target = $region13
    $region12: #{tpu_custom_call.1} parent=1 // pred_region
      _
    $region13: #{tpu_custom_call.1} parent=1 // pred_fallthru
      _
    %p15 = scmp.eq.s32.totalorder 0, 0
    // Predicated region
    $region14: #{tpu_custom_call.1} parent=1 // pred_check
      %p16 = pneg %p15
    $region15: #{tpu_custom_call.1} parent=1 // pred_check_branch
      %18 = sbr.rel (%p16) target = $region17
    $region16: #{tpu_custom_call.1} parent=1 // pred_region
      %19 = vst [vmem:[#allocation2] sm:$0xff] 0.0
      %20 = vst [vmem:[#allocation2 + $0x8] sm:$0xff] 0.0
      %21 = vst [vmem:[#allocation2 + $0x10] sm:$0xff] 0.0
      %22 = vst [vmem:[#allocation2 + $0x18] sm:$0xff] 0.0
      %23 = vst [vmem:[#allocation2 + $0x20] sm:$0xff] 0.0
      %24 = vst [vmem:[#allocation2 + $0x28] sm:$0xff] 0.0
      %25 = vst [vmem:[#allocation2 + $0x30] sm:$0xff] 0.0
      %26 = vst [vmem:[#allocation2 + $0x38] sm:$0xff] 0.0
      %27 = vst [vmem:[#allocation2 + $0x40] sm:$0xff] 0.0
      %28 = vst [vmem:[#allocation2 + $0x48] sm:$0xff] 0.0
      %29 = vst [vmem:[#allocation2 + $0x50] sm:$0xff] 0.0
      %30 = vst [vmem:[#allocation2 + $0x58] sm:$0xff] 0.0
      %31 = vst [vmem:[#allocation2 + $0x60] sm:$0xff] 0.0
      %32 = vst [vmem:[#allocation2 + $0x68] sm:$0xff] 0.0
      %33 = vst [vmem:[#allocation2 + $0x70] sm:$0xff] 0.0
      %34 = vst [vmem:[#allocation2 + $0x78] sm:$0xff] 0.0
      %35 = vst [vmem:[#allocation2 + $0x80] sm:$0xff] 0.0
      %36 = vst [vmem:[#allocation2 + $0x88] sm:$0xff] 0.0
      %37 = vst [vmem:[#allocation2 + $0x90] sm:$0xff] 0.0
      %38 = vst [vmem:[#allocation2 + $0x98] sm:$0xff] 0.0
      %39 = vst [vmem:[#allocation2 + $0xa0] sm:$0xff] 0.0
      %40 = vst [vmem:[#allocation2 + $0xa8] sm:$0xff] 0.0
      %41 = vst [vmem:[#allocation2 + $0xb0] sm:$0xff] 0.0
      %42 = vst [vmem:[#allocation2 + $0xb8] sm:$0xff] 0.0
      %43 = vst [vmem:[#allocation2 + $0xc0] sm:$0xff] 0.0
      %44 = vst [vmem:[#allocation2 + $0xc8] sm:$0xff] 0.0
      %45 = vst [vmem:[#allocation2 + $0xd0] sm:$0xff] 0.0
      %46 = vst [vmem:[#allocation2 + $0xd8] sm:$0xff] 0.0
      %47 = vst [vmem:[#allocation2 + $0xe0] sm:$0xff] 0.0
      %48 = vst [vmem:[#allocation2 + $0xe8] sm:$0xff] 0.0
      %49 = vst [vmem:[#allocation2 + $0xf0] sm:$0xff] 0.0
      %50 = vst [vmem:[#allocation2 + $0xf8] sm:$0xff] 0.0
      %51 = vst [vmem:[#allocation2 + $0x100] sm:$0xff] 0.0
      %52 = vst [vmem:[#allocation2 + $0x108] sm:$0xff] 0.0
      %53 = vst [vmem:[#allocation2 + $0x110] sm:$0xff] 0.0
      %54 = vst [vmem:[#allocation2 + $0x118] sm:$0xff] 0.0
      %55 = vst [vmem:[#allocation2 + $0x120] sm:$0xff] 0.0
      %56 = vst [vmem:[#allocation2 + $0x128] sm:$0xff] 0.0
      %57 = vst [vmem:[#allocation2 + $0x130] sm:$0xff] 0.0
      %58 = vst [vmem:[#allocation2 + $0x138] sm:$0xff] 0.0
      %59 = vst [vmem:[#allocation2 + $0x140] sm:$0xff] 0.0
      %60 = vst [vmem:[#allocation2 + $0x148] sm:$0xff] 0.0
      %61 = vst [vmem:[#allocation2 + $0x150] sm:$0xff] 0.0
      %62 = vst [vmem:[#allocation2 + $0x158] sm:$0xff] 0.0
      %63 = vst [vmem:[#allocation2 + $0x160] sm:$0xff] 0.0
      %64 = vst [vmem:[#allocation2 + $0x168] sm:$0xff] 0.0
      %65 = vst [vmem:[#allocation2 + $0x170] sm:$0xff] 0.0
      %66 = vst [vmem:[#allocation2 + $0x178] sm:$0xff] 0.0
      %67 = vst [vmem:[#allocation2 + $0x180] sm:$0xff] 0.0
      %68 = vst [vmem:[#allocation2 + $0x188] sm:$0xff] 0.0
      %69 = vst [vmem:[#allocation2 + $0x190] sm:$0xff] 0.0
      %70 = vst [vmem:[#allocation2 + $0x198] sm:$0xff] 0.0
      %71 = vst [vmem:[#allocation2 + $0x1a0] sm:$0xff] 0.0
      %72 = vst [vmem:[#allocation2 + $0x1a8] sm:$0xff] 0.0
      %73 = vst [vmem:[#allocation2 + $0x1b0] sm:$0xff] 0.0
      %74 = vst [vmem:[#allocation2 + $0x1b8] sm:$0xff] 0.0
      %75 = vst [vmem:[#allocation2 + $0x1c0] sm:$0xff] 0.0
      %76 = vst [vmem:[#allocation2 + $0x1c8] sm:$0xff] 0.0
      %77 = vst [vmem:[#allocation2 + $0x1d0] sm:$0xff] 0.0
      %78 = vst [vmem:[#allocation2 + $0x1d8] sm:$0xff] 0.0
      %79 = vst [vmem:[#allocation2 + $0x1e0] sm:$0xff] 0.0
      %80 = vst [vmem:[#allocation2 + $0x1e8] sm:$0xff] 0.0
      %81 = vst [vmem:[#allocation2 + $0x1f0] sm:$0xff] 0.0
      %82 = vst [vmem:[#allocation2 + $0x1f8] sm:$0xff] 0.0
    $region17: #{tpu_custom_call.1} parent=1 // pred_fallthru
      _
    %v83 = vld [vmem:[#allocation2] sm:$0xff]
    %v84 = vld [vmem:[#allocation2 + $0x8] sm:$0xff]
    %v85 = vld [vmem:[#allocation2 + $0x10] sm:$0xff]
    %v86 = vld [vmem:[#allocation2 + $0x18] sm:$0xff]
    %v87 = vld [vmem:[#allocation2 + $0x20] sm:$0xff]
    %v88 = vld [vmem:[#allocation2 + $0x28] sm:$0xff]
    %v89 = vld [vmem:[#allocation2 + $0x30] sm:$0xff]
    %v90 = vld [vmem:[#allocation2 + $0x38] sm:$0xff]
    %v91 = vld [vmem:[#allocation2 + $0x40] sm:$0xff]
    %v92 = vld [vmem:[#allocation2 + $0x48] sm:$0xff]
    %v93 = vld [vmem:[#allocation2 + $0x50] sm:$0xff]
    %v94 = vld [vmem:[#allocation2 + $0x58] sm:$0xff]
    %v95 = vld [vmem:[#allocation2 + $0x60] sm:$0xff]
    %v96 = vld [vmem:[#allocation2 + $0x68] sm:$0xff]
    %v97 = vld [vmem:[#allocation2 + $0x70] sm:$0xff]
    %v98 = vld [vmem:[#allocation2 + $0x78] sm:$0xff]
    %v99 = vld [vmem:[#allocation2 + $0x80] sm:$0xff]
    %v100 = vld [vmem:[#allocation2 + $0x88] sm:$0xff]
    %v101 = vld [vmem:[#allocation2 + $0x90] sm:$0xff]
    %v102 = vld [vmem:[#allocation2 + $0x98] sm:$0xff]
    %v103 = vld [vmem:[#allocation2 + $0xa0] sm:$0xff]
    %v104 = vld [vmem:[#allocation2 + $0xa8] sm:$0xff]
    %v105 = vld [vmem:[#allocation2 + $0xb0] sm:$0xff]
    %v106 = vld [vmem:[#allocation2 + $0xb8] sm:$0xff]
    %v107 = vld [vmem:[#allocation2 + $0xc0] sm:$0xff]
    %v108 = vld [vmem:[#allocation2 + $0xc8] sm:$0xff]
    %v109 = vld [vmem:[#allocation2 + $0xd0] sm:$0xff]
    %v110 = vld [vmem:[#allocation2 + $0xd8] sm:$0xff]
    %v111 = vld [vmem:[#allocation2 + $0xe0] sm:$0xff]
    %v112 = vld [vmem:[#allocation2 + $0xe8] sm:$0xff]
    %v113 = vld [vmem:[#allocation2 + $0xf0] sm:$0xff]
    %v114 = vld [vmem:[#allocation2 + $0xf8] sm:$0xff]
    %v115 = vld [vmem:[#allocation2 + $0x100] sm:$0xff]
    %v116 = vld [vmem:[#allocation2 + $0x108] sm:$0xff]
    %v117 = vld [vmem:[#allocation2 + $0x110] sm:$0xff]
    %v118 = vld [vmem:[#allocation2 + $0x118] sm:$0xff]
    %v119 = vld [vmem:[#allocation2 + $0x120] sm:$0xff]
    %v120 = vld [vmem:[#allocation2 + $0x128] sm:$0xff]
    %v121 = vld [vmem:[#allocation2 + $0x130] sm:$0xff]
    %v122 = vld [vmem:[#allocation2 + $0x138] sm:$0xff]
    %v123 = vld [vmem:[#allocation2 + $0x140] sm:$0xff]
    %v124 = vld [vmem:[#allocation2 + $0x148] sm:$0xff]
    %v125 = vld [vmem:[#allocation2 + $0x150] sm:$0xff]
    %v126 = vld [vmem:[#allocation2 + $0x158] sm:$0xff]
    %v127 = vld [vmem:[#allocation2 + $0x160] sm:$0xff]
    %v128 = vld [vmem:[#allocation2 + $0x168] sm:$0xff]
    %v129 = vld [vmem:[#allocation2 + $0x170] sm:$0xff]
    %v130 = vld [vmem:[#allocation2 + $0x178] sm:$0xff]
    %v131 = vld [vmem:[#allocation2 + $0x180] sm:$0xff]
    %v132 = vld [vmem:[#allocation2 + $0x188] sm:$0xff]
    %v133 = vld [vmem:[#allocation2 + $0x190] sm:$0xff]
    %v134 = vld [vmem:[#allocation2 + $0x198] sm:$0xff]
    %v135 = vld [vmem:[#allocation2 + $0x1a0] sm:$0xff]
    %v136 = vld [vmem:[#allocation2 + $0x1a8] sm:$0xff]
    %v137 = vld [vmem:[#allocation2 + $0x1b0] sm:$0xff]
    %v138 = vld [vmem:[#allocation2 + $0x1b8] sm:$0xff]
    %v139 = vld [vmem:[#allocation2 + $0x1c0] sm:$0xff]
    %v140 = vld [vmem:[#allocation2 + $0x1c8] sm:$0xff]
    %v141 = vld [vmem:[#allocation2 + $0x1d0] sm:$0xff]
    %v142 = vld [vmem:[#allocation2 + $0x1d8] sm:$0xff]
    %v143 = vld [vmem:[#allocation2 + $0x1e0] sm:$0xff]
    %v144 = vld [vmem:[#allocation2 + $0x1e8] sm:$0xff]
    %v145 = vld [vmem:[#allocation2 + $0x1f0] sm:$0xff]
    %v146 = vld [vmem:[#allocation2 + $0x1f8] sm:$0xff]
    %v147 = vld [vmem:[%s0] sm:$0xff]
    %v148 = vld [vmem:[%s0 + $0x8] sm:$0xff]
    %v149 = vld [vmem:[%s0 + $0x10] sm:$0xff]
    %v150 = vld [vmem:[%s0 + $0x18] sm:$0xff]
    %v151 = vld [vmem:[%s0 + $0x20] sm:$0xff]
    %v152 = vld [vmem:[%s0 + $0x28] sm:$0xff]
    %v153 = vld [vmem:[%s0 + $0x30] sm:$0xff]
    %v154 = vld [vmem:[%s0 + $0x38] sm:$0xff]
    %v155 = vld [vmem:[%s0 + $0x40] sm:$0xff]
    %v156 = vld [vmem:[%s0 + $0x48] sm:$0xff]
    %v157 = vld [vmem:[%s0 + $0x50] sm:$0xff]
    %v158 = vld [vmem:[%s0 + $0x58] sm:$0xff]
    %v159 = vld [vmem:[%s0 + $0x60] sm:$0xff]
    %v160 = vld [vmem:[%s0 + $0x68] sm:$0xff]
    %v161 = vld [vmem:[%s0 + $0x70] sm:$0xff]
    %v162 = vld [vmem:[%s0 + $0x78] sm:$0xff]
    %v163 = vld [vmem:[%s0 + $0x80] sm:$0xff]
    %v164 = vld [vmem:[%s0 + $0x88] sm:$0xff]
    %v165 = vld [vmem:[%s0 + $0x90] sm:$0xff]
    %v166 = vld [vmem:[%s0 + $0x98] sm:$0xff]
    %v167 = vld [vmem:[%s0 + $0xa0] sm:$0xff]
    %v168 = vld [vmem:[%s0 + $0xa8] sm:$0xff]
    %v169 = vld [vmem:[%s0 + $0xb0] sm:$0xff]
    %v170 = vld [vmem:[%s0 + $0xb8] sm:$0xff]
    %v171 = vld [vmem:[%s0 + $0xc0] sm:$0xff]
    %v172 = vld [vmem:[%s0 + $0xc8] sm:$0xff]
    %v173 = vld [vmem:[%s0 + $0xd0] sm:$0xff]
    %v174 = vld [vmem:[%s0 + $0xd8] sm:$0xff]
    %v175 = vld [vmem:[%s0 + $0xe0] sm:$0xff]
    %v176 = vld [vmem:[%s0 + $0xe8] sm:$0xff]
    %v177 = vld [vmem:[%s0 + $0xf0] sm:$0xff]
    %v178 = vld [vmem:[%s0 + $0xf8] sm:$0xff]
    %v179 = vld [vmem:[%s0 + $0x100] sm:$0xff]
    %v180 = vld [vmem:[%s0 + $0x108] sm:$0xff]
    %v181 = vld [vmem:[%s0 + $0x110] sm:$0xff]
    %v182 = vld [vmem:[%s0 + $0x118] sm:$0xff]
    %v183 = vld [vmem:[%s0 + $0x120] sm:$0xff]
    %v184 = vld [vmem:[%s0 + $0x128] sm:$0xff]
    %v185 = vld [vmem:[%s0 + $0x130] sm:$0xff]
    %v186 = vld [vmem:[%s0 + $0x138] sm:$0xff]
    %v187 = vld [vmem:[%s0 + $0x140] sm:$0xff]
    %v188 = vld [vmem:[%s0 + $0x148] sm:$0xff]
    %v189 = vld [vmem:[%s0 + $0x150] sm:$0xff]
    %v190 = vld [vmem:[%s0 + $0x158] sm:$0xff]
    %v191 = vld [vmem:[%s0 + $0x160] sm:$0xff]
    %v192 = vld [vmem:[%s0 + $0x168] sm:$0xff]
    %v193 = vld [vmem:[%s0 + $0x170] sm:$0xff]
    %v194 = vld [vmem:[%s0 + $0x178] sm:$0xff]
    %v195 = vld [vmem:[%s0 + $0x180] sm:$0xff]
    %v196 = vld [vmem:[%s0 + $0x188] sm:$0xff]
    %v197 = vld [vmem:[%s0 + $0x190] sm:$0xff]
    %v198 = vld [vmem:[%s0 + $0x198] sm:$0xff]
    %v199 = vld [vmem:[%s0 + $0x1a0] sm:$0xff]
    %v200 = vld [vmem:[%s0 + $0x1a8] sm:$0xff]
    %v201 = vld [vmem:[%s0 + $0x1b0] sm:$0xff]
    %v202 = vld [vmem:[%s0 + $0x1b8] sm:$0xff]
    %v203 = vld [vmem:[%s0 + $0x1c0] sm:$0xff]
    %v204 = vld [vmem:[%s0 + $0x1c8] sm:$0xff]
    %v205 = vld [vmem:[%s0 + $0x1d0] sm:$0xff]
    %v206 = vld [vmem:[%s0 + $0x1d8] sm:$0xff]
    %v207 = vld [vmem:[%s0 + $0x1e0] sm:$0xff]
    %v208 = vld [vmem:[%s0 + $0x1e8] sm:$0xff]
    %v209 = vld [vmem:[%s0 + $0x1f0] sm:$0xff]
    %v210 = vld [vmem:[%s0 + $0x1f8] sm:$0xff]
    %v211 = vld [vmem:[%s1] sm:$0xff]
    %v212 = vld [vmem:[%s1 + $0x8] sm:$0xff]
    %v213 = vld [vmem:[%s1 + $0x10] sm:$0xff]
    %v214 = vld [vmem:[%s1 + $0x18] sm:$0xff]
    %v215 = vld [vmem:[%s1 + $0x20] sm:$0xff]
    %v216 = vld [vmem:[%s1 + $0x28] sm:$0xff]
    %vm217 = vcmask 392192
    %v219 = vsel %vm217, %v147, 0
    %v222 = vsel %vm217, %v148, 0
    %v225 = vsel %vm217, %v149, 0
    %v228 = vsel %vm217, %v150, 0
    %v231 = vsel %vm217, %v151, 0
    %v234 = vsel %vm217, %v152, 0
    %v237 = vsel %vm217, %v153, 0
    %v240 = vsel %vm217, %v154, 0
    %v243 = vsel %vm217, %v155, 0
    %v246 = vsel %vm217, %v156, 0
    %v249 = vsel %vm217, %v157, 0
    %v252 = vsel %vm217, %v158, 0
    %v255 = vsel %vm217, %v159, 0
    %v258 = vsel %vm217, %v160, 0
    %v261 = vsel %vm217, %v161, 0
    %v264 = vsel %vm217, %v162, 0
    %v267 = vsel %vm217, %v163, 0
    %v270 = vsel %vm217, %v164, 0
    %v273 = vsel %vm217, %v165, 0
    %v276 = vsel %vm217, %v166, 0
    %v279 = vsel %vm217, %v167, 0
    %v282 = vsel %vm217, %v168, 0
    %v285 = vsel %vm217, %v169, 0
    %v288 = vsel %vm217, %v170, 0
    %v291 = vsel %vm217, %v171, 0
    %v294 = vsel %vm217, %v172, 0
    %v297 = vsel %vm217, %v173, 0
    %v300 = vsel %vm217, %v174, 0
    %v303 = vsel %vm217, %v175, 0
    %v306 = vsel %vm217, %v176, 0
    %v309 = vsel %vm217, %v177, 0
    %v312 = vsel %vm217, %v178, 0
    %v315 = vsel %vm217, %v179, 0
    %v318 = vsel %vm217, %v180, 0
    %v321 = vsel %vm217, %v181, 0
    %v324 = vsel %vm217, %v182, 0
    %v327 = vsel %vm217, %v183, 0
    %v330 = vsel %vm217, %v184, 0
    %v333 = vsel %vm217, %v185, 0
    %v336 = vsel %vm217, %v186, 0
    %v339 = vsel %vm217, %v187, 0
    %v342 = vsel %vm217, %v188, 0
    %v345 = vsel %vm217, %v189, 0
    %v348 = vsel %vm217, %v190, 0
    %v351 = vsel %vm217, %v191, 0
    %v354 = vsel %vm217, %v192, 0
    %v357 = vsel %vm217, %v193, 0
    %v360 = vsel %vm217, %v194, 0
    %v363 = vsel %vm217, %v195, 0
    %v366 = vsel %vm217, %v196, 0
    %v369 = vsel %vm217, %v197, 0
    %v372 = vsel %vm217, %v198, 0
    %v375 = vsel %vm217, %v199, 0
    %v378 = vsel %vm217, %v200, 0
    %v381 = vsel %vm217, %v201, 0
    %v384 = vsel %vm217, %v202, 0
    %v387 = vsel %vm217, %v203, 0
    %v390 = vsel %vm217, %v204, 0
    %v393 = vsel %vm217, %v205, 0
    %v396 = vsel %vm217, %v206, 0
    %v399 = vsel %vm217, %v207, 0
    %v402 = vsel %vm217, %v208, 0
    %v405 = vsel %vm217, %v209, 0
    %v408 = vsel %vm217, %v210, 0
    %410 = vmatprep.subr.mxu0 0.0
    %411 = vmatpush1.msra.mxu0 0.0
    %412 = vmatprep.subr.mxu0 0.0
    %413 = vmatpush1.msra.mxu0 0.0
    %414 = vmatprep.subr.mxu0 0.0
    %415 = vmatpush1.msra.mxu0 0.0
    %416 = vmatprep.subr.mxu0 0.0
    %417 = vmatpush1.msra.mxu0 0.0
    %418 = vmatprep.subr.mxu0 0.0
    %419 = vmatpush1.msra.mxu0 0.0
    %420 = vmatprep.subr.mxu0 0.0
    %421 = vmatpush1.msra.mxu0 0.0
    %422 = vmatprep.subr.mxu0 0.0
    %423 = vmatpush1.msra.mxu0 0.0
    %424 = vmatprep.subr.mxu0 0.0
    %425 = vmatpush1.msra.mxu0 0.0
    %426 = vmatprep.subr.mxu0 0.0
    %427 = vmatpush1.msra.mxu0 0.0
    %428 = vmatprep.subr.mxu0 0.0
    %429 = vmatpush1.msra.mxu0 0.0
    %430 = vmatprep.subr.mxu0 0.0
    %431 = vmatpush1.msra.mxu0 %v216
    %432 = vmatprep.subr.mxu0 0.0
    %433 = vmatpush1.msra.mxu0 %v215
    %434 = vmatprep.subr.mxu0 0.0
    %435 = vmatpush1.msra.mxu0 %v214
    %436 = vmatprep.subr.mxu0 0.0
    %437 = vmatpush1.msra.mxu0 %v213
    %438 = vmatprep.subr.mxu0 0.0
    %439 = vmatpush1.msra.mxu0 %v212
    %440 = vmatprep.subr.mxu0 0.0
    %441 = vmatpush1.msra.mxu0 %v211
    %442 = vmatprep.subr.mxu0 0.0
    %443 = vmatpush2.msra.mxu0 0.0
    %444 = vmatprep.subr.mxu0 0.0
    %445 = vmatpush2.msra.mxu0 0.0
    %446 = vmatprep.subr.mxu0 0.0
    %447 = vmatpush2.msra.mxu0 0.0
    %448 = vmatprep.subr.mxu0 0.0
    %449 = vmatpush2.msra.mxu0 0.0
    %450 = vmatprep.subr.mxu0 0.0
    %451 = vmatpush2.msra.mxu0 0.0
    %452 = vmatprep.subr.mxu0 0.0
    %453 = vmatpush2.msra.mxu0 0.0
    %454 = vmatprep.subr.mxu0 0.0
    %455 = vmatpush2.msra.mxu0 0.0
    %456 = vmatprep.subr.mxu0 0.0
    %457 = vmatpush2.msra.mxu0 0.0
    %458 = vmatprep.subr.mxu0 0.0
    %459 = vmatpush2.msra.mxu0 0.0
    %460 = vmatprep.subr.mxu0 0.0
    %461 = vmatpush2.msra.mxu0 0.0
    %462 = vmatprep.subr.mxu0 0.0
    %463 = vmatpush2.msra.mxu0 0.0
    %464 = vmatprep.subr.mxu0 0.0
    %465 = vmatpush2.msra.mxu0 0.0
    %466 = vmatprep.subr.mxu0 0.0
    %467 = vmatpush2.msra.mxu0 0.0
    %468 = vmatprep.subr.mxu0 0.0
    %469 = vmatpush2.msra.mxu0 0.0
    %470 = vmatprep.subr.mxu0 0.0
    %471 = vmatpush2.msra.mxu0 0.0
    %472 = vmatprep.subr.mxu0 0.0
    %473 = vmatpush2.msra.mxu0 0.0
    %474 = vmatprep.mubr.f32.mxu0 0.0
    %475 = vmatmul.mubr.f32.gmra.mxu0 %v219
    %v476 = vpop.f32.mrf.mxu0
    %v477 = vadd.f32 0.0, %v476
    %v478 = vpop.f32.mrf.mxu0
    %479 = vmatprep.mubr.f32.mxu0 0.0
    %480 = vmatmul.mubr.f32.gmra.mxu0 %v222
    %v481 = vpop.f32.mrf.mxu0
    %v482 = vadd.f32 0.0, %v481
    %v483 = vpop.f32.mrf.mxu0
    %484 = vmatprep.mubr.f32.mxu0 0.0
    %485 = vmatmul.mubr.f32.gmra.mxu0 %v225
    %v486 = vpop.f32.mrf.mxu0
    %v487 = vadd.f32 0.0, %v486
    %v488 = vpop.f32.mrf.mxu0
    %489 = vmatprep.mubr.f32.mxu0 0.0
    %490 = vmatmul.mubr.f32.gmra.mxu0 %v228
    %v491 = vpop.f32.mrf.mxu0
    %v492 = vadd.f32 0.0, %v491
    %v493 = vpop.f32.mrf.mxu0
    %494 = vmatprep.mubr.f32.mxu0 0.0
    %495 = vmatmul.mubr.f32.gmra.mxu0 %v231
    %v496 = vpop.f32.mrf.mxu0
    %v497 = vadd.f32 0.0, %v496
    %v498 = vpop.f32.mrf.mxu0
    %499 = vmatprep.mubr.f32.mxu0 0.0
    %500 = vmatmul.mubr.f32.gmra.mxu0 %v234
    %v501 = vpop.f32.mrf.mxu0
    %v502 = vadd.f32 0.0, %v501
    %v503 = vpop.f32.mrf.mxu0
    %504 = vmatprep.mubr.f32.mxu0 0.0
    %505 = vmatmul.mubr.f32.gmra.mxu0 %v237
    %v506 = vpop.f32.mrf.mxu0
    %v507 = vadd.f32 0.0, %v506
    %v508 = vpop.f32.mrf.mxu0
    %509 = vmatprep.mubr.f32.mxu0 0.0
    %510 = vmatmul.mubr.f32.gmra.mxu0 %v240
    %v511 = vpop.f32.mrf.mxu0
    %v512 = vadd.f32 0.0, %v511
    %v513 = vpop.f32.mrf.mxu0
    %514 = vmatprep.mubr.f32.mxu0 0.0
    %515 = vmatmul.mubr.f32.gmra.mxu0 %v243
    %v516 = vpop.f32.mrf.mxu0
    %v517 = vadd.f32 0.0, %v516
    %v518 = vpop.f32.mrf.mxu0
    %519 = vmatprep.mubr.f32.mxu0 0.0
    %520 = vmatmul.mubr.f32.gmra.mxu0 %v246
    %v521 = vpop.f32.mrf.mxu0
    %v522 = vadd.f32 0.0, %v521
    %v523 = vpop.f32.mrf.mxu0
    %524 = vmatprep.mubr.f32.mxu0 0.0
    %525 = vmatmul.mubr.f32.gmra.mxu0 %v249
    %v526 = vpop.f32.mrf.mxu0
    %v527 = vadd.f32 0.0, %v526
    %v528 = vpop.f32.mrf.mxu0
    %529 = vmatprep.mubr.f32.mxu0 0.0
    %530 = vmatmul.mubr.f32.gmra.mxu0 %v252
    %v531 = vpop.f32.mrf.mxu0
    %v532 = vadd.f32 0.0, %v531
    %v533 = vpop.f32.mrf.mxu0
    %534 = vmatprep.mubr.f32.mxu0 0.0
    %535 = vmatmul.mubr.f32.gmra.mxu0 %v255
    %v536 = vpop.f32.mrf.mxu0
    %v537 = vadd.f32 0.0, %v536
    %v538 = vpop.f32.mrf.mxu0
    %539 = vmatprep.mubr.f32.mxu0 0.0
    %540 = vmatmul.mubr.f32.gmra.mxu0 %v258
    %v541 = vpop.f32.mrf.mxu0
    %v542 = vadd.f32 0.0, %v541
    %v543 = vpop.f32.mrf.mxu0
    %544 = vmatprep.mubr.f32.mxu0 0.0
    %545 = vmatmul.mubr.f32.gmra.mxu0 %v261
    %v546 = vpop.f32.mrf.mxu0
    %v547 = vadd.f32 0.0, %v546
    %v548 = vpop.f32.mrf.mxu0
    %549 = vmatprep.mubr.f32.mxu0 0.0
    %550 = vmatmul.mubr.f32.gmra.mxu0 %v264
    %v551 = vpop.f32.mrf.mxu0
    %v552 = vadd.f32 0.0, %v551
    %v553 = vpop.f32.mrf.mxu0
    %554 = vmatprep.mubr.f32.mxu0 0.0
    %555 = vmatmul.mubr.f32.gmra.mxu0 %v267
    %v556 = vpop.f32.mrf.mxu0
    %v557 = vadd.f32 0.0, %v556
    %v558 = vpop.f32.mrf.mxu0
    %559 = vmatprep.mubr.f32.mxu0 0.0
    %560 = vmatmul.mubr.f32.gmra.mxu0 %v270
    %v561 = vpop.f32.mrf.mxu0
    %v562 = vadd.f32 0.0, %v561
    %v563 = vpop.f32.mrf.mxu0
    %564 = vmatprep.mubr.f32.mxu0 0.0
    %565 = vmatmul.mubr.f32.gmra.mxu0 %v273
    %v566 = vpop.f32.mrf.mxu0
    %v567 = vadd.f32 0.0, %v566
    %v568 = vpop.f32.mrf.mxu0
    %569 = vmatprep.mubr.f32.mxu0 0.0
    %570 = vmatmul.mubr.f32.gmra.mxu0 %v276
    %v571 = vpop.f32.mrf.mxu0
    %v572 = vadd.f32 0.0, %v571
    %v573 = vpop.f32.mrf.mxu0
    %574 = vmatprep.mubr.f32.mxu0 0.0
    %575 = vmatmul.mubr.f32.gmra.mxu0 %v279
    %v576 = vpop.f32.mrf.mxu0
    %v577 = vadd.f32 0.0, %v576
    %v578 = vpop.f32.mrf.mxu0
    %579 = vmatprep.mubr.f32.mxu0 0.0
    %580 = vmatmul.mubr.f32.gmra.mxu0 %v282
    %v581 = vpop.f32.mrf.mxu0
    %v582 = vadd.f32 0.0, %v581
    %v583 = vpop.f32.mrf.mxu0
    %584 = vmatprep.mubr.f32.mxu0 0.0
    %585 = vmatmul.mubr.f32.gmra.mxu0 %v285
    %v586 = vpop.f32.mrf.mxu0
    %v587 = vadd.f32 0.0, %v586
    %v588 = vpop.f32.mrf.mxu0
    %589 = vmatprep.mubr.f32.mxu0 0.0
    %590 = vmatmul.mubr.f32.gmra.mxu0 %v288
    %v591 = vpop.f32.mrf.mxu0
    %v592 = vadd.f32 0.0, %v591
    %v593 = vpop.f32.mrf.mxu0
    %594 = vmatprep.mubr.f32.mxu0 0.0
    %595 = vmatmul.mubr.f32.gmra.mxu0 %v291
    %v596 = vpop.f32.mrf.mxu0
    %v597 = vadd.f32 0.0, %v596
    %v598 = vpop.f32.mrf.mxu0
    %599 = vmatprep.mubr.f32.mxu0 0.0
    %600 = vmatmul.mubr.f32.gmra.mxu0 %v294
    %v601 = vpop.f32.mrf.mxu0
    %v602 = vadd.f32 0.0, %v601
    %v603 = vpop.f32.mrf.mxu0
    %604 = vmatprep.mubr.f32.mxu0 0.0
    %605 = vmatmul.mubr.f32.gmra.mxu0 %v297
    %v606 = vpop.f32.mrf.mxu0
    %v607 = vadd.f32 0.0, %v606
    %v608 = vpop.f32.mrf.mxu0
    %609 = vmatprep.mubr.f32.mxu0 0.0
    %610 = vmatmul.mubr.f32.gmra.mxu0 %v300
    %v611 = vpop.f32.mrf.mxu0
    %v612 = vadd.f32 0.0, %v611
    %v613 = vpop.f32.mrf.mxu0
    %614 = vmatprep.mubr.f32.mxu0 0.0
    %615 = vmatmul.mubr.f32.gmra.mxu0 %v303
    %v616 = vpop.f32.mrf.mxu0
    %v617 = vadd.f32 0.0, %v616
    %v618 = vpop.f32.mrf.mxu0
    %619 = vmatprep.mubr.f32.mxu0 0.0
    %620 = vmatmul.mubr.f32.gmra.mxu0 %v306
    %v621 = vpop.f32.mrf.mxu0
    %v622 = vadd.f32 0.0, %v621
    %v623 = vpop.f32.mrf.mxu0
    %624 = vmatprep.mubr.f32.mxu0 0.0
    %625 = vmatmul.mubr.f32.gmra.mxu0 %v309
    %v626 = vpop.f32.mrf.mxu0
    %v627 = vadd.f32 0.0, %v626
    %v628 = vpop.f32.mrf.mxu0
    %629 = vmatprep.mubr.f32.mxu0 0.0
    %630 = vmatmul.mubr.f32.gmra.mxu0 %v312
    %v631 = vpop.f32.mrf.mxu0
    %v632 = vadd.f32 0.0, %v631
    %v633 = vpop.f32.mrf.mxu0
    %634 = vmatprep.mubr.f32.mxu0 0.0
    %635 = vmatmul.mubr.f32.gmra.mxu0 %v315
    %v636 = vpop.f32.mrf.mxu0
    %v637 = vadd.f32 0.0, %v636
    %v638 = vpop.f32.mrf.mxu0
    %639 = vmatprep.mubr.f32.mxu0 0.0
    %640 = vmatmul.mubr.f32.gmra.mxu0 %v318
    %v641 = vpop.f32.mrf.mxu0
    %v642 = vadd.f32 0.0, %v641
    %v643 = vpop.f32.mrf.mxu0
    %644 = vmatprep.mubr.f32.mxu0 0.0
    %645 = vmatmul.mubr.f32.gmra.mxu0 %v321
    %v646 = vpop.f32.mrf.mxu0
    %v647 = vadd.f32 0.0, %v646
    %v648 = vpop.f32.mrf.mxu0
    %649 = vmatprep.mubr.f32.mxu0 0.0
    %650 = vmatmul.mubr.f32.gmra.mxu0 %v324
    %v651 = vpop.f32.mrf.mxu0
    %v652 = vadd.f32 0.0, %v651
    %v653 = vpop.f32.mrf.mxu0
    %654 = vmatprep.mubr.f32.mxu0 0.0
    %655 = vmatmul.mubr.f32.gmra.mxu0 %v327
    %v656 = vpop.f32.mrf.mxu0
    %v657 = vadd.f32 0.0, %v656
    %v658 = vpop.f32.mrf.mxu0
    %659 = vmatprep.mubr.f32.mxu0 0.0
    %660 = vmatmul.mubr.f32.gmra.mxu0 %v330
    %v661 = vpop.f32.mrf.mxu0
    %v662 = vadd.f32 0.0, %v661
    %v663 = vpop.f32.mrf.mxu0
    %664 = vmatprep.mubr.f32.mxu0 0.0
    %665 = vmatmul.mubr.f32.gmra.mxu0 %v333
    %v666 = vpop.f32.mrf.mxu0
    %v667 = vadd.f32 0.0, %v666
    %v668 = vpop.f32.mrf.mxu0
    %669 = vmatprep.mubr.f32.mxu0 0.0
    %670 = vmatmul.mubr.f32.gmra.mxu0 %v336
    %v671 = vpop.f32.mrf.mxu0
    %v672 = vadd.f32 0.0, %v671
    %v673 = vpop.f32.mrf.mxu0
    %674 = vmatprep.mubr.f32.mxu0 0.0
    %675 = vmatmul.mubr.f32.gmra.mxu0 %v339
    %v676 = vpop.f32.mrf.mxu0
    %v677 = vadd.f32 0.0, %v676
    %v678 = vpop.f32.mrf.mxu0
    %679 = vmatprep.mubr.f32.mxu0 0.0
    %680 = vmatmul.mubr.f32.gmra.mxu0 %v342
    %v681 = vpop.f32.mrf.mxu0
    %v682 = vadd.f32 0.0, %v681
    %v683 = vpop.f32.mrf.mxu0
    %684 = vmatprep.mubr.f32.mxu0 0.0
    %685 = vmatmul.mubr.f32.gmra.mxu0 %v345
    %v686 = vpop.f32.mrf.mxu0
    %v687 = vadd.f32 0.0, %v686
    %v688 = vpop.f32.mrf.mxu0
    %689 = vmatprep.mubr.f32.mxu0 0.0
    %690 = vmatmul.mubr.f32.gmra.mxu0 %v348
    %v691 = vpop.f32.mrf.mxu0
    %v692 = vadd.f32 0.0, %v691
    %v693 = vpop.f32.mrf.mxu0
    %694 = vmatprep.mubr.f32.mxu0 0.0
    %695 = vmatmul.mubr.f32.gmra.mxu0 %v351
    %v696 = vpop.f32.mrf.mxu0
    %v697 = vadd.f32 0.0, %v696
    %v698 = vpop.f32.mrf.mxu0
    %699 = vmatprep.mubr.f32.mxu0 0.0
    %700 = vmatmul.mubr.f32.gmra.mxu0 %v354
    %v701 = vpop.f32.mrf.mxu0
    %v702 = vadd.f32 0.0, %v701
    %v703 = vpop.f32.mrf.mxu0
    %704 = vmatprep.mubr.f32.mxu0 0.0
    %705 = vmatmul.mubr.f32.gmra.mxu0 %v357
    %v706 = vpop.f32.mrf.mxu0
    %v707 = vadd.f32 0.0, %v706
    %v708 = vpop.f32.mrf.mxu0
    %709 = vmatprep.mubr.f32.mxu0 0.0
    %710 = vmatmul.mubr.f32.gmra.mxu0 %v360
    %v711 = vpop.f32.mrf.mxu0
    %v712 = vadd.f32 0.0, %v711
    %v713 = vpop.f32.mrf.mxu0
    %714 = vmatprep.mubr.f32.mxu0 0.0
    %715 = vmatmul.mubr.f32.gmra.mxu0 %v363
    %v716 = vpop.f32.mrf.mxu0
    %v717 = vadd.f32 0.0, %v716
    %v718 = vpop.f32.mrf.mxu0
    %719 = vmatprep.mubr.f32.mxu0 0.0
    %720 = vmatmul.mubr.f32.gmra.mxu0 %v366
    %v721 = vpop.f32.mrf.mxu0
    %v722 = vadd.f32 0.0, %v721
    %v723 = vpop.f32.mrf.mxu0
    %724 = vmatprep.mubr.f32.mxu0 0.0
    %725 = vmatmul.mubr.f32.gmra.mxu0 %v369
    %v726 = vpop.f32.mrf.mxu0
    %v727 = vadd.f32 0.0, %v726
    %v728 = vpop.f32.mrf.mxu0
    %729 = vmatprep.mubr.f32.mxu0 0.0
    %730 = vmatmul.mubr.f32.gmra.mxu0 %v372
    %v731 = vpop.f32.mrf.mxu0
    %v732 = vadd.f32 0.0, %v731
    %v733 = vpop.f32.mrf.mxu0
    %734 = vmatprep.mubr.f32.mxu0 0.0
    %735 = vmatmul.mubr.f32.gmra.mxu0 %v375
    %v736 = vpop.f32.mrf.mxu0
    %v737 = vadd.f32 0.0, %v736
    %v738 = vpop.f32.mrf.mxu0
    %739 = vmatprep.mubr.f32.mxu0 0.0
    %740 = vmatmul.mubr.f32.gmra.mxu0 %v378
    %v741 = vpop.f32.mrf.mxu0
    %v742 = vadd.f32 0.0, %v741
    %v743 = vpop.f32.mrf.mxu0
    %744 = vmatprep.mubr.f32.mxu0 0.0
    %745 = vmatmul.mubr.f32.gmra.mxu0 %v381
    %v746 = vpop.f32.mrf.mxu0
    %v747 = vadd.f32 0.0, %v746
    %v748 = vpop.f32.mrf.mxu0
    %749 = vmatprep.mubr.f32.mxu0 0.0
    %750 = vmatmul.mubr.f32.gmra.mxu0 %v384
    %v751 = vpop.f32.mrf.mxu0
    %v752 = vadd.f32 0.0, %v751
    %v753 = vpop.f32.mrf.mxu0
    %754 = vmatprep.mubr.f32.mxu0 0.0
    %755 = vmatmul.mubr.f32.gmra.mxu0 %v387
    %v756 = vpop.f32.mrf.mxu0
    %v757 = vadd.f32 0.0, %v756
    %v758 = vpop.f32.mrf.mxu0
    %759 = vmatprep.mubr.f32.mxu0 0.0
    %760 = vmatmul.mubr.f32.gmra.mxu0 %v390
    %v761 = vpop.f32.mrf.mxu0
    %v762 = vadd.f32 0.0, %v761
    %v763 = vpop.f32.mrf.mxu0
    %764 = vmatprep.mubr.f32.mxu0 0.0
    %765 = vmatmul.mubr.f32.gmra.mxu0 %v393
    %v766 = vpop.f32.mrf.mxu0
    %v767 = vadd.f32 0.0, %v766
    %v768 = vpop.f32.mrf.mxu0
    %769 = vmatprep.mubr.f32.mxu0 0.0
    %770 = vmatmul.mubr.f32.gmra.mxu0 %v396
    %v771 = vpop.f32.mrf.mxu0
    %v772 = vadd.f32 0.0, %v771
    %v773 = vpop.f32.mrf.mxu0
    %774 = vmatprep.mubr.f32.mxu0 0.0
    %775 = vmatmul.mubr.f32.gmra.mxu0 %v399
    %v776 = vpop.f32.mrf.mxu0
    %v777 = vadd.f32 0.0, %v776
    %v778 = vpop.f32.mrf.mxu0
    %779 = vmatprep.mubr.f32.mxu0 0.0
    %780 = vmatmul.mubr.f32.gmra.mxu0 %v402
    %v781 = vpop.f32.mrf.mxu0
    %v782 = vadd.f32 0.0, %v781
    %v783 = vpop.f32.mrf.mxu0
    %784 = vmatprep.mubr.f32.mxu0 0.0
    %785 = vmatmul.mubr.f32.gmra.mxu0 %v405
    %v786 = vpop.f32.mrf.mxu0
    %v787 = vadd.f32 0.0, %v786
    %v788 = vpop.f32.mrf.mxu0
    %789 = vmatprep.mubr.f32.mxu0 0.0
    %790 = vmatmul.mubr.f32.gmra.mxu0 %v408
    %v791 = vpop.f32.mrf.mxu0
    %v792 = vadd.f32 0.0, %v791
    %v793 = vpop.f32.mrf.mxu0
    %794 = vdwg.mxu0
    %v795 = vadd.f32 %v83, %v477
    %v796 = vadd.f32 %v84, %v482
    %v797 = vadd.f32 %v85, %v487
    %v798 = vadd.f32 %v86, %v492
    %v799 = vadd.f32 %v87, %v497
    %v800 = vadd.f32 %v88, %v502
    %v801 = vadd.f32 %v89, %v507
    %v802 = vadd.f32 %v90, %v512
    %v803 = vadd.f32 %v91, %v517
    %v804 = vadd.f32 %v92, %v522
    %v805 = vadd.f32 %v93, %v527
    %v806 = vadd.f32 %v94, %v532
    %v807 = vadd.f32 %v95, %v537
    %v808 = vadd.f32 %v96, %v542
    %v809 = vadd.f32 %v97, %v547
    %v810 = vadd.f32 %v98, %v552
    %v811 = vadd.f32 %v99, %v557
    %v812 = vadd.f32 %v100, %v562
    %v813 = vadd.f32 %v101, %v567
    %v814 = vadd.f32 %v102, %v572
    %v815 = vadd.f32 %v103, %v577
    %v816 = vadd.f32 %v104, %v582
    %v817 = vadd.f32 %v105, %v587
    %v818 = vadd.f32 %v106, %v592
    %v819 = vadd.f32 %v107, %v597
    %v820 = vadd.f32 %v108, %v602
    %v821 = vadd.f32 %v109, %v607
    %v822 = vadd.f32 %v110, %v612
    %v823 = vadd.f32 %v111, %v617
    %v824 = vadd.f32 %v112, %v622
    %v825 = vadd.f32 %v113, %v627
    %v826 = vadd.f32 %v114, %v632
    %v827 = vadd.f32 %v115, %v637
    %v828 = vadd.f32 %v116, %v642
    %v829 = vadd.f32 %v117, %v647
    %v830 = vadd.f32 %v118, %v652
    %v831 = vadd.f32 %v119, %v657
    %v832 = vadd.f32 %v120, %v662
    %v833 = vadd.f32 %v121, %v667
    %v834 = vadd.f32 %v122, %v672
    %v835 = vadd.f32 %v123, %v677
    %v836 = vadd.f32 %v124, %v682
    %v837 = vadd.f32 %v125, %v687
    %v838 = vadd.f32 %v126, %v692
    %v839 = vadd.f32 %v127, %v697
    %v840 = vadd.f32 %v128, %v702
    %v841 = vadd.f32 %v129, %v707
    %v842 = vadd.f32 %v130, %v712
    %v843 = vadd.f32 %v131, %v717
    %v844 = vadd.f32 %v132, %v722
    %v845 = vadd.f32 %v133, %v727
    %v846 = vadd.f32 %v134, %v732
    %v847 = vadd.f32 %v135, %v737
    %v848 = vadd.f32 %v136, %v742
    %v849 = vadd.f32 %v137, %v747
    %v850 = vadd.f32 %v138, %v752
    %v851 = vadd.f32 %v139, %v757
    %v852 = vadd.f32 %v140, %v762
    %v853 = vadd.f32 %v141, %v767
    %v854 = vadd.f32 %v142, %v772
    %v855 = vadd.f32 %v143, %v777
    %v856 = vadd.f32 %v144, %v782
    %v857 = vadd.f32 %v145, %v787
    %v858 = vadd.f32 %v146, %v792
    %859 = vst [vmem:[#allocation2] sm:$0xff] %v795
    %860 = vst [vmem:[#allocation2 + $0x8] sm:$0xff] %v796
    %861 = vst [vmem:[#allocation2 + $0x10] sm:$0xff] %v797
    %862 = vst [vmem:[#allocation2 + $0x18] sm:$0xff] %v798
    %863 = vst [vmem:[#allocation2 + $0x20] sm:$0xff] %v799
    %864 = vst [vmem:[#allocation2 + $0x28] sm:$0xff] %v800
    %865 = vst [vmem:[#allocation2 + $0x30] sm:$0xff] %v801
    %866 = vst [vmem:[#allocation2 + $0x38] sm:$0xff] %v802
    %867 = vst [vmem:[#allocation2 + $0x40] sm:$0xff] %v803
    %868 = vst [vmem:[#allocation2 + $0x48] sm:$0xff] %v804
    %869 = vst [vmem:[#allocation2 + $0x50] sm:$0xff] %v805
    %870 = vst [vmem:[#allocation2 + $0x58] sm:$0xff] %v806
    %871 = vst [vmem:[#allocation2 + $0x60] sm:$0xff] %v807
    %872 = vst [vmem:[#allocation2 + $0x68] sm:$0xff] %v808
    %873 = vst [vmem:[#allocation2 + $0x70] sm:$0xff] %v809
    %874 = vst [vmem:[#allocation2 + $0x78] sm:$0xff] %v810
    %875 = vst [vmem:[#allocation2 + $0x80] sm:$0xff] %v811
    %876 = vst [vmem:[#allocation2 + $0x88] sm:$0xff] %v812
    %877 = vst [vmem:[#allocation2 + $0x90] sm:$0xff] %v813
    %878 = vst [vmem:[#allocation2 + $0x98] sm:$0xff] %v814
    %879 = vst [vmem:[#allocation2 + $0xa0] sm:$0xff] %v815
    %880 = vst [vmem:[#allocation2 + $0xa8] sm:$0xff] %v816
    %881 = vst [vmem:[#allocation2 + $0xb0] sm:$0xff] %v817
    %882 = vst [vmem:[#allocation2 + $0xb8] sm:$0xff] %v818
    %883 = vst [vmem:[#allocation2 + $0xc0] sm:$0xff] %v819
    %884 = vst [vmem:[#allocation2 + $0xc8] sm:$0xff] %v820
    %885 = vst [vmem:[#allocation2 + $0xd0] sm:$0xff] %v821
    %886 = vst [vmem:[#allocation2 + $0xd8] sm:$0xff] %v822
    %887 = vst [vmem:[#allocation2 + $0xe0] sm:$0xff] %v823
    %888 = vst [vmem:[#allocation2 + $0xe8] sm:$0xff] %v824
    %889 = vst [vmem:[#allocation2 + $0xf0] sm:$0xff] %v825
    %890 = vst [vmem:[#allocation2 + $0xf8] sm:$0xff] %v826
    %891 = vst [vmem:[#allocation2 + $0x100] sm:$0xff] %v827
    %892 = vst [vmem:[#allocation2 + $0x108] sm:$0xff] %v828
    %893 = vst [vmem:[#allocation2 + $0x110] sm:$0xff] %v829
    %894 = vst [vmem:[#allocation2 + $0x118] sm:$0xff] %v830
    %895 = vst [vmem:[#allocation2 + $0x120] sm:$0xff] %v831
    %896 = vst [vmem:[#allocation2 + $0x128] sm:$0xff] %v832
    %897 = vst [vmem:[#allocation2 + $0x130] sm:$0xff] %v833
    %898 = vst [vmem:[#allocation2 + $0x138] sm:$0xff] %v834
    %899 = vst [vmem:[#allocation2 + $0x140] sm:$0xff] %v835
    %900 = vst [vmem:[#allocation2 + $0x148] sm:$0xff] %v836
    %901 = vst [vmem:[#allocation2 + $0x150] sm:$0xff] %v837
    %902 = vst [vmem:[#allocation2 + $0x158] sm:$0xff] %v838
    %903 = vst [vmem:[#allocation2 + $0x160] sm:$0xff] %v839
    %904 = vst [vmem:[#allocation2 + $0x168] sm:$0xff] %v840
    %905 = vst [vmem:[#allocation2 + $0x170] sm:$0xff] %v841
    %906 = vst [vmem:[#allocation2 + $0x178] sm:$0xff] %v842
    %907 = vst [vmem:[#allocation2 + $0x180] sm:$0xff] %v843
    %908 = vst [vmem:[#allocation2 + $0x188] sm:$0xff] %v844
    %909 = vst [vmem:[#allocation2 + $0x190] sm:$0xff] %v845
    %910 = vst [vmem:[#allocation2 + $0x198] sm:$0xff] %v846
    %911 = vst [vmem:[#allocation2 + $0x1a0] sm:$0xff] %v847
    %912 = vst [vmem:[#allocation2 + $0x1a8] sm:$0xff] %v848
    %913 = vst [vmem:[#allocation2 + $0x1b0] sm:$0xff] %v849
    %914 = vst [vmem:[#allocation2 + $0x1b8] sm:$0xff] %v850
    %915 = vst [vmem:[#allocation2 + $0x1c0] sm:$0xff] %v851
    %916 = vst [vmem:[#allocation2 + $0x1c8] sm:$0xff] %v852
    %917 = vst [vmem:[#allocation2 + $0x1d0] sm:$0xff] %v853
    %918 = vst [vmem:[#allocation2 + $0x1d8] sm:$0xff] %v854
    %919 = vst [vmem:[#allocation2 + $0x1e0] sm:$0xff] %v855
    %920 = vst [vmem:[#allocation2 + $0x1e8] sm:$0xff] %v856
    %921 = vst [vmem:[#allocation2 + $0x1f0] sm:$0xff] %v857
    %922 = vst [vmem:[#allocation2 + $0x1f8] sm:$0xff] %v858
    // Predicated region
    $region18: #{tpu_custom_call.1} parent=1 // pred_check
      %p923 = pneg %p15
    $region19: #{tpu_custom_call.1} parent=1 // pred_check_branch
      %925 = sbr.rel (%p923) target = $region21
    $region20: #{tpu_custom_call.1} parent=1 // pred_region
      %v926 = vld [vmem:[#allocation2] sm:$0xff]
      %v927 = vld [vmem:[#allocation2 + $0x8] sm:$0xff]
      %v928 = vld [vmem:[#allocation2 + $0x10] sm:$0xff]
      %v929 = vld [vmem:[#allocation2 + $0x18] sm:$0xff]
      %v930 = vld [vmem:[#allocation2 + $0x20] sm:$0xff]
      %v931 = vld [vmem:[#allocation2 + $0x28] sm:$0xff]
      %v932 = vld [vmem:[#allocation2 + $0x30] sm:$0xff]
      %v933 = vld [vmem:[#allocation2 + $0x38] sm:$0xff]
      %v934 = vld [vmem:[#allocation2 + $0x40] sm:$0xff]
      %v935 = vld [vmem:[#allocation2 + $0x48] sm:$0xff]
      %v936 = vld [vmem:[#allocation2 + $0x50] sm:$0xff]
      %v937 = vld [vmem:[#allocation2 + $0x58] sm:$0xff]
      %v938 = vld [vmem:[#allocation2 + $0x60] sm:$0xff]
      %v939 = vld [vmem:[#allocation2 + $0x68] sm:$0xff]
      %v940 = vld [vmem:[#allocation2 + $0x70] sm:$0xff]
      %v941 = vld [vmem:[#allocation2 + $0x78] sm:$0xff]
      %v942 = vld [vmem:[#allocation2 + $0x80] sm:$0xff]
      %v943 = vld [vmem:[#allocation2 + $0x88] sm:$0xff]
      %v944 = vld [vmem:[#allocation2 + $0x90] sm:$0xff]
      %v945 = vld [vmem:[#allocation2 + $0x98] sm:$0xff]
      %v946 = vld [vmem:[#allocation2 + $0xa0] sm:$0xff]
      %v947 = vld [vmem:[#allocation2 + $0xa8] sm:$0xff]
      %v948 = vld [vmem:[#allocation2 + $0xb0] sm:$0xff]
      %v949 = vld [vmem:[#allocation2 + $0xb8] sm:$0xff]
      %v950 = vld [vmem:[#allocation2 + $0xc0] sm:$0xff]
      %v951 = vld [vmem:[#allocation2 + $0xc8] sm:$0xff]
      %v952 = vld [vmem:[#allocation2 + $0xd0] sm:$0xff]
      %v953 = vld [vmem:[#allocation2 + $0xd8] sm:$0xff]
      %v954 = vld [vmem:[#allocation2 + $0xe0] sm:$0xff]
      %v955 = vld [vmem:[#allocation2 + $0xe8] sm:$0xff]
      %v956 = vld [vmem:[#allocation2 + $0xf0] sm:$0xff]
      %v957 = vld [vmem:[#allocation2 + $0xf8] sm:$0xff]
      %v958 = vld [vmem:[#allocation2 + $0x100] sm:$0xff]
      %v959 = vld [vmem:[#allocation2 + $0x108] sm:$0xff]
      %v960 = vld [vmem:[#allocation2 + $0x110] sm:$0xff]
      %v961 = vld [vmem:[#allocation2 + $0x118] sm:$0xff]
      %v962 = vld [vmem:[#allocation2 + $0x120] sm:$0xff]
      %v963 = vld [vmem:[#allocation2 + $0x128] sm:$0xff]
      %v964 = vld [vmem:[#allocation2 + $0x130] sm:$0xff]
      %v965 = vld [vmem:[#allocation2 + $0x138] sm:$0xff]
      %v966 = vld [vmem:[#allocation2 + $0x140] sm:$0xff]
      %v967 = vld [vmem:[#allocation2 + $0x148] sm:$0xff]
      %v968 = vld [vmem:[#allocation2 + $0x150] sm:$0xff]
      %v969 = vld [vmem:[#allocation2 + $0x158] sm:$0xff]
      %v970 = vld [vmem:[#allocation2 + $0x160] sm:$0xff]
      %v971 = vld [vmem:[#allocation2 + $0x168] sm:$0xff]
      %v972 = vld [vmem:[#allocation2 + $0x170] sm:$0xff]
      %v973 = vld [vmem:[#allocation2 + $0x178] sm:$0xff]
      %v974 = vld [vmem:[#allocation2 + $0x180] sm:$0xff]
      %v975 = vld [vmem:[#allocation2 + $0x188] sm:$0xff]
      %v976 = vld [vmem:[#allocation2 + $0x190] sm:$0xff]
      %v977 = vld [vmem:[#allocation2 + $0x198] sm:$0xff]
      %v978 = vld [vmem:[#allocation2 + $0x1a0] sm:$0xff]
      %v979 = vld [vmem:[#allocation2 + $0x1a8] sm:$0xff]
      %v980 = vld [vmem:[#allocation2 + $0x1b0] sm:$0xff]
      %v981 = vld [vmem:[#allocation2 + $0x1b8] sm:$0xff]
      %v982 = vld [vmem:[#allocation2 + $0x1c0] sm:$0xff]
      %v983 = vld [vmem:[#allocation2 + $0x1c8] sm:$0xff]
      %v984 = vld [vmem:[#allocation2 + $0x1d0] sm:$0xff]
      %v985 = vld [vmem:[#allocation2 + $0x1d8] sm:$0xff]
      %v986 = vld [vmem:[#allocation2 + $0x1e0] sm:$0xff]
      %v987 = vld [vmem:[#allocation2 + $0x1e8] sm:$0xff]
      %v988 = vld [vmem:[#allocation2 + $0x1f0] sm:$0xff]
      %v989 = vld [vmem:[#allocation2 + $0x1f8] sm:$0xff]
      %v990 = vld [vmem:[%s2] sm:$0x1]
      %v992 = vlaneseq
      %v993 = vshrl.u32 %v992, 7
      %v994 = vsub.s32 0, %v993
      %v995 = vrot.slane %v990, %v994
      %v997 = vadd.f32 %v926, %v995
      %v998 = vadd.f32 %v927, %v995
      %v999 = vadd.f32 %v928, %v995
      %v1000 = vadd.f32 %v929, %v995
      %v1001 = vadd.f32 %v930, %v995
      %v1002 = vadd.f32 %v931, %v995
      %v1003 = vadd.f32 %v932, %v995
      %v1004 = vadd.f32 %v933, %v995
      %v1005 = vadd.f32 %v934, %v995
      %v1006 = vadd.f32 %v935, %v995
      %v1007 = vadd.f32 %v936, %v995
      %v1008 = vadd.f32 %v937, %v995
      %v1009 = vadd.f32 %v938, %v995
      %v1010 = vadd.f32 %v939, %v995
      %v1011 = vadd.f32 %v940, %v995
      %v1012 = vadd.f32 %v941, %v995
      %v1013 = vadd.f32 %v942, %v995
      %v1014 = vadd.f32 %v943, %v995
      %v1015 = vadd.f32 %v944, %v995
      %v1016 = vadd.f32 %v945, %v995
      %v1017 = vadd.f32 %v946, %v995
      %v1018 = vadd.f32 %v947, %v995
      %v1019 = vadd.f32 %v948, %v995
      %v1020 = vadd.f32 %v949, %v995
      %v1021 = vadd.f32 %v950, %v995
      %v1022 = vadd.f32 %v951, %v995
      %v1023 = vadd.f32 %v952, %v995
      %v1024 = vadd.f32 %v953, %v995
      %v1025 = vadd.f32 %v954, %v995
      %v1026 = vadd.f32 %v955, %v995
      %v1027 = vadd.f32 %v956, %v995
      %v1028 = vadd.f32 %v957, %v995
      %v1029 = vadd.f32 %v958, %v995
      %v1030 = vadd.f32 %v959, %v995
      %v1031 = vadd.f32 %v960, %v995
      %v1032 = vadd.f32 %v961, %v995
      %v1033 = vadd.f32 %v962, %v995
      %v1034 = vadd.f32 %v963, %v995
      %v1035 = vadd.f32 %v964, %v995
      %v1036 = vadd.f32 %v965, %v995
      %v1037 = vadd.f32 %v966, %v995
      %v1038 = vadd.f32 %v967, %v995
      %v1039 = vadd.f32 %v968, %v995
      %v1040 = vadd.f32 %v969, %v995
      %v1041 = vadd.f32 %v970, %v995
      %v1042 = vadd.f32 %v971, %v995
      %v1043 = vadd.f32 %v972, %v995
      %v1044 = vadd.f32 %v973, %v995
      %v1045 = vadd.f32 %v974, %v995
      %v1046 = vadd.f32 %v975, %v995
      %v1047 = vadd.f32 %v976, %v995
      %v1048 = vadd.f32 %v977, %v995
      %v1049 = vadd.f32 %v978, %v995
      %v1050 = vadd.f32 %v979, %v995
      %v1051 = vadd.f32 %v980, %v995
      %v1052 = vadd.f32 %v981, %v995
      %v1053 = vadd.f32 %v982, %v995
      %v1054 = vadd.f32 %v983, %v995
      %v1055 = vadd.f32 %v984, %v995
      %v1056 = vadd.f32 %v985, %v995
      %v1057 = vadd.f32 %v986, %v995
      %v1058 = vadd.f32 %v987, %v995
      %v1059 = vadd.f32 %v988, %v995
      %v1060 = vadd.f32 %v989, %v995
      %vm1061 = vcmp.ge.f32.partialorder %v997, 0.0
      %vm1062 = vcmp.ge.f32.partialorder %v998, 0.0
      %vm1063 = vcmp.ge.f32.partialorder %v999, 0.0
      %vm1064 = vcmp.ge.f32.partialorder %v1000, 0.0
      %vm1065 = vcmp.ge.f32.partialorder %v1001, 0.0
      %vm1066 = vcmp.ge.f32.partialorder %v1002, 0.0
      %vm1067 = vcmp.ge.f32.partialorder %v1003, 0.0
      %vm1068 = vcmp.ge.f32.partialorder %v1004, 0.0
      %vm1069 = vcmp.ge.f32.partialorder %v1005, 0.0
      %vm1070 = vcmp.ge.f32.partialorder %v1006, 0.0
      %vm1071 = vcmp.ge.f32.partialorder %v1007, 0.0
      %vm1072 = vcmp.ge.f32.partialorder %v1008, 0.0
      %vm1073 = vcmp.ge.f32.partialorder %v1009, 0.0
      %vm1074 = vcmp.ge.f32.partialorder %v1010, 0.0
      %vm1075 = vcmp.ge.f32.partialorder %v1011, 0.0
      %vm1076 = vcmp.ge.f32.partialorder %v1012, 0.0
      %vm1077 = vcmp.ge.f32.partialorder %v1013, 0.0
      %vm1078 = vcmp.ge.f32.partialorder %v1014, 0.0
      %vm1079 = vcmp.ge.f32.partialorder %v1015, 0.0
      %vm1080 = vcmp.ge.f32.partialorder %v1016, 0.0
      %vm1081 = vcmp.ge.f32.partialorder %v1017, 0.0
      %vm1082 = vcmp.ge.f32.partialorder %v1018, 0.0
      %vm1083 = vcmp.ge.f32.partialorder %v1019, 0.0
      %vm1084 = vcmp.ge.f32.partialorder %v1020, 0.0
      %vm1085 = vcmp.ge.f32.partialorder %v1021, 0.0
      %vm1086 = vcmp.ge.f32.partialorder %v1022, 0.0
      %vm1087 = vcmp.ge.f32.partialorder %v1023, 0.0
      %vm1088 = vcmp.ge.f32.partialorder %v1024, 0.0
      %vm1089 = vcmp.ge.f32.partialorder %v1025, 0.0
      %vm1090 = vcmp.ge.f32.partialorder %v1026, 0.0
      %vm1091 = vcmp.ge.f32.partialorder %v1027, 0.0
      %vm1092 = vcmp.ge.f32.partialorder %v1028, 0.0
      %vm1093 = vcmp.ge.f32.partialorder %v1029, 0.0
      %vm1094 = vcmp.ge.f32.partialorder %v1030, 0.0
      %vm1095 = vcmp.ge.f32.partialorder %v1031, 0.0
      %vm1096 = vcmp.ge.f32.partialorder %v1032, 0.0
      %vm1097 = vcmp.ge.f32.partialorder %v1033, 0.0
      %vm1098 = vcmp.ge.f32.partialorder %v1034, 0.0
      %vm1099 = vcmp.ge.f32.partialorder %v1035, 0.0
      %vm1100 = vcmp.ge.f32.partialorder %v1036, 0.0
      %vm1101 = vcmp.ge.f32.partialorder %v1037, 0.0
      %vm1102 = vcmp.ge.f32.partialorder %v1038, 0.0
      %vm1103 = vcmp.ge.f32.partialorder %v1039, 0.0
      %vm1104 = vcmp.ge.f32.partialorder %v1040, 0.0
      %vm1105 = vcmp.ge.f32.partialorder %v1041, 0.0
      %vm1106 = vcmp.ge.f32.partialorder %v1042, 0.0
      %vm1107 = vcmp.ge.f32.partialorder %v1043, 0.0
      %vm1108 = vcmp.ge.f32.partialorder %v1044, 0.0
      %vm1109 = vcmp.ge.f32.partialorder %v1045, 0.0
      %vm1110 = vcmp.ge.f32.partialorder %v1046, 0.0
      %vm1111 = vcmp.ge.f32.partialorder %v1047, 0.0
      %vm1112 = vcmp.ge.f32.partialorder %v1048, 0.0
      %vm1113 = vcmp.ge.f32.partialorder %v1049, 0.0
      %vm1114 = vcmp.ge.f32.partialorder %v1050, 0.0
      %vm1115 = vcmp.ge.f32.partialorder %v1051, 0.0
      %vm1116 = vcmp.ge.f32.partialorder %v1052, 0.0
      %vm1117 = vcmp.ge.f32.partialorder %v1053, 0.0
      %vm1118 = vcmp.ge.f32.partialorder %v1054, 0.0
      %vm1119 = vcmp.ge.f32.partialorder %v1055, 0.0
      %vm1120 = vcmp.ge.f32.partialorder %v1056, 0.0
      %vm1121 = vcmp.ge.f32.partialorder %v1057, 0.0
      %vm1122 = vcmp.ge.f32.partialorder %v1058, 0.0
      %vm1123 = vcmp.ge.f32.partialorder %v1059, 0.0
      %vm1124 = vcmp.ge.f32.partialorder %v1060, 0.0
      %v1125 = vmul.f32 %v997, 0.2
      %v1126 = vmul.f32 %v998, 0.2
      %v1127 = vmul.f32 %v999, 0.2
      %v1128 = vmul.f32 %v1000, 0.2
      %v1129 = vmul.f32 %v1001, 0.2
      %v1130 = vmul.f32 %v1002, 0.2
      %v1131 = vmul.f32 %v1003, 0.2
      %v1132 = vmul.f32 %v1004, 0.2
      %v1133 = vmul.f32 %v1005, 0.2
      %v1134 = vmul.f32 %v1006, 0.2
      %v1135 = vmul.f32 %v1007, 0.2
      %v1136 = vmul.f32 %v1008, 0.2
      %v1137 = vmul.f32 %v1009, 0.2
      %v1138 = vmul.f32 %v1010, 0.2
      %v1139 = vmul.f32 %v1011, 0.2
      %v1140 = vmul.f32 %v1012, 0.2
      %v1141 = vmul.f32 %v1013, 0.2
      %v1142 = vmul.f32 %v1014, 0.2
      %v1143 = vmul.f32 %v1015, 0.2
      %v1144 = vmul.f32 %v1016, 0.2
      %v1145 = vmul.f32 %v1017, 0.2
      %v1146 = vmul.f32 %v1018, 0.2
      %v1147 = vmul.f32 %v1019, 0.2
      %v1148 = vmul.f32 %v1020, 0.2
      %v1149 = vmul.f32 %v1021, 0.2
      %v1150 = vmul.f32 %v1022, 0.2
      %v1151 = vmul.f32 %v1023, 0.2
      %v1152 = vmul.f32 %v1024, 0.2
      %v1153 = vmul.f32 %v1025, 0.2
      %v1154 = vmul.f32 %v1026, 0.2
      %v1155 = vmul.f32 %v1027, 0.2
      %v1156 = vmul.f32 %v1028, 0.2
      %v1157 = vmul.f32 %v1029, 0.2
      %v1158 = vmul.f32 %v1030, 0.2
      %v1159 = vmul.f32 %v1031, 0.2
      %v1160 = vmul.f32 %v1032, 0.2
      %v1161 = vmul.f32 %v1033, 0.2
      %v1162 = vmul.f32 %v1034, 0.2
      %v1163 = vmul.f32 %v1035, 0.2
      %v1164 = vmul.f32 %v1036, 0.2
      %v1165 = vmul.f32 %v1037, 0.2
      %v1166 = vmul.f32 %v1038, 0.2
      %v1167 = vmul.f32 %v1039, 0.2
      %v1168 = vmul.f32 %v1040, 0.2
      %v1169 = vmul.f32 %v1041, 0.2
      %v1170 = vmul.f32 %v1042, 0.2
      %v1171 = vmul.f32 %v1043, 0.2
      %v1172 = vmul.f32 %v1044, 0.2
      %v1173 = vmul.f32 %v1045, 0.2
      %v1174 = vmul.f32 %v1046, 0.2
      %v1175 = vmul.f32 %v1047, 0.2
      %v1176 = vmul.f32 %v1048, 0.2
      %v1177 = vmul.f32 %v1049, 0.2
      %v1178 = vmul.f32 %v1050, 0.2
      %v1179 = vmul.f32 %v1051, 0.2
      %v1180 = vmul.f32 %v1052, 0.2
      %v1181 = vmul.f32 %v1053, 0.2
      %v1182 = vmul.f32 %v1054, 0.2
      %v1183 = vmul.f32 %v1055, 0.2
      %v1184 = vmul.f32 %v1056, 0.2
      %v1185 = vmul.f32 %v1057, 0.2
      %v1186 = vmul.f32 %v1058, 0.2
      %v1187 = vmul.f32 %v1059, 0.2
      %v1188 = vmul.f32 %v1060, 0.2
      %v1189 = vsel %vm1061, %v997, %v1125
      %v1190 = vsel %vm1062, %v998, %v1126
      %v1191 = vsel %vm1063, %v999, %v1127
      %v1192 = vsel %vm1064, %v1000, %v1128
      %v1193 = vsel %vm1065, %v1001, %v1129
      %v1194 = vsel %vm1066, %v1002, %v1130
      %v1195 = vsel %vm1067, %v1003, %v1131
      %v1196 = vsel %vm1068, %v1004, %v1132
      %v1197 = vsel %vm1069, %v1005, %v1133
      %v1198 = vsel %vm1070, %v1006, %v1134
      %v1199 = vsel %vm1071, %v1007, %v1135
      %v1200 = vsel %vm1072, %v1008, %v1136
      %v1201 = vsel %vm1073, %v1009, %v1137
      %v1202 = vsel %vm1074, %v1010, %v1138
      %v1203 = vsel %vm1075, %v1011, %v1139
      %v1204 = vsel %vm1076, %v1012, %v1140
      %v1205 = vsel %vm1077, %v1013, %v1141
      %v1206 = vsel %vm1078, %v1014, %v1142
      %v1207 = vsel %vm1079, %v1015, %v1143
      %v1208 = vsel %vm1080, %v1016, %v1144
      %v1209 = vsel %vm1081, %v1017, %v1145
      %v1210 = vsel %vm1082, %v1018, %v1146
      %v1211 = vsel %vm1083, %v1019, %v1147
      %v1212 = vsel %vm1084, %v1020, %v1148
      %v1213 = vsel %vm1085, %v1021, %v1149
      %v1214 = vsel %vm1086, %v1022, %v1150
      %v1215 = vsel %vm1087, %v1023, %v1151
      %v1216 = vsel %vm1088, %v1024, %v1152
      %v1217 = vsel %vm1089, %v1025, %v1153
      %v1218 = vsel %vm1090, %v1026, %v1154
      %v1219 = vsel %vm1091, %v1027, %v1155
      %v1220 = vsel %vm1092, %v1028, %v1156
      %v1221 = vsel %vm1093, %v1029, %v1157
      %v1222 = vsel %vm1094, %v1030, %v1158
      %v1223 = vsel %vm1095, %v1031, %v1159
      %v1224 = vsel %vm1096, %v1032, %v1160
      %v1225 = vsel %vm1097, %v1033, %v1161
      %v1226 = vsel %vm1098, %v1034, %v1162
      %v1227 = vsel %vm1099, %v1035, %v1163
      %v1228 = vsel %vm1100, %v1036, %v1164
      %v1229 = vsel %vm1101, %v1037, %v1165
      %v1230 = vsel %vm1102, %v1038, %v1166
      %v1231 = vsel %vm1103, %v1039, %v1167
      %v1232 = vsel %vm1104, %v1040, %v1168
      %v1233 = vsel %vm1105, %v1041, %v1169
      %v1234 = vsel %vm1106, %v1042, %v1170
      %v1235 = vsel %vm1107, %v1043, %v1171
      %v1236 = vsel %vm1108, %v1044, %v1172
      %v1237 = vsel %vm1109, %v1045, %v1173
      %v1238 = vsel %vm1110, %v1046, %v1174
      %v1239 = vsel %vm1111, %v1047, %v1175
      %v1240 = vsel %vm1112, %v1048, %v1176
      %v1241 = vsel %vm1113, %v1049, %v1177
      %v1242 = vsel %vm1114, %v1050, %v1178
      %v1243 = vsel %vm1115, %v1051, %v1179
      %v1244 = vsel %vm1116, %v1052, %v1180
      %v1245 = vsel %vm1117, %v1053, %v1181
      %v1246 = vsel %vm1118, %v1054, %v1182
      %v1247 = vsel %vm1119, %v1055, %v1183
      %v1248 = vsel %vm1120, %v1056, %v1184
      %v1249 = vsel %vm1121, %v1057, %v1185
      %v1250 = vsel %vm1122, %v1058, %v1186
      %v1251 = vsel %vm1123, %v1059, %v1187
      %v1252 = vsel %vm1124, %v1060, %v1188
      %1253 = vst [vmem:[#allocation3] sm:$0xff] %v1189
      %1254 = vst [vmem:[#allocation3 + $0x8] sm:$0xff] %v1190
      %1255 = vst [vmem:[#allocation3 + $0x10] sm:$0xff] %v1191
      %1256 = vst [vmem:[#allocation3 + $0x18] sm:$0xff] %v1192
      %1257 = vst [vmem:[#allocation3 + $0x20] sm:$0xff] %v1193
      %1258 = vst [vmem:[#allocation3 + $0x28] sm:$0xff] %v1194
      %1259 = vst [vmem:[#allocation3 + $0x30] sm:$0xff] %v1195
      %1260 = vst [vmem:[#allocation3 + $0x38] sm:$0xff] %v1196
      %1261 = vst [vmem:[#allocation3 + $0x40] sm:$0xff] %v1197
      %1262 = vst [vmem:[#allocation3 + $0x48] sm:$0xff] %v1198
      %1263 = vst [vmem:[#allocation3 + $0x50] sm:$0xff] %v1199
      %1264 = vst [vmem:[#allocation3 + $0x58] sm:$0xff] %v1200
      %1265 = vst [vmem:[#allocation3 + $0x60] sm:$0xff] %v1201
      %1266 = vst [vmem:[#allocation3 + $0x68] sm:$0xff] %v1202
      %1267 = vst [vmem:[#allocation3 + $0x70] sm:$0xff] %v1203
      %1268 = vst [vmem:[#allocation3 + $0x78] sm:$0xff] %v1204
      %1269 = vst [vmem:[#allocation3 + $0x80] sm:$0xff] %v1205
      %1270 = vst [vmem:[#allocation3 + $0x88] sm:$0xff] %v1206
      %1271 = vst [vmem:[#allocation3 + $0x90] sm:$0xff] %v1207
      %1272 = vst [vmem:[#allocation3 + $0x98] sm:$0xff] %v1208
      %1273 = vst [vmem:[#allocation3 + $0xa0] sm:$0xff] %v1209
      %1274 = vst [vmem:[#allocation3 + $0xa8] sm:$0xff] %v1210
      %1275 = vst [vmem:[#allocation3 + $0xb0] sm:$0xff] %v1211
      %1276 = vst [vmem:[#allocation3 + $0xb8] sm:$0xff] %v1212
      %1277 = vst [vmem:[#allocation3 + $0xc0] sm:$0xff] %v1213
      %1278 = vst [vmem:[#allocation3 + $0xc8] sm:$0xff] %v1214
      %1279 = vst [vmem:[#allocation3 + $0xd0] sm:$0xff] %v1215
      %1280 = vst [vmem:[#allocation3 + $0xd8] sm:$0xff] %v1216
      %1281 = vst [vmem:[#allocation3 + $0xe0] sm:$0xff] %v1217
      %1282 = vst [vmem:[#allocation3 + $0xe8] sm:$0xff] %v1218
      %1283 = vst [vmem:[#allocation3 + $0xf0] sm:$0xff] %v1219
      %1284 = vst [vmem:[#allocation3 + $0xf8] sm:$0xff] %v1220
      %1285 = vst [vmem:[#allocation3 + $0x100] sm:$0xff] %v1221
      %1286 = vst [vmem:[#allocation3 + $0x108] sm:$0xff] %v1222
      %1287 = vst [vmem:[#allocation3 + $0x110] sm:$0xff] %v1223
      %1288 = vst [vmem:[#allocation3 + $0x118] sm:$0xff] %v1224
      %1289 = vst [vmem:[#allocation3 + $0x120] sm:$0xff] %v1225
      %1290 = vst [vmem:[#allocation3 + $0x128] sm:$0xff] %v1226
      %1291 = vst [vmem:[#allocation3 + $0x130] sm:$0xff] %v1227
      %1292 = vst [vmem:[#allocation3 + $0x138] sm:$0xff] %v1228
      %1293 = vst [vmem:[#allocation3 + $0x140] sm:$0xff] %v1229
      %1294 = vst [vmem:[#allocation3 + $0x148] sm:$0xff] %v1230
      %1295 = vst [vmem:[#allocation3 + $0x150] sm:$0xff] %v1231
      %1296 = vst [vmem:[#allocation3 + $0x158] sm:$0xff] %v1232
      %1297 = vst [vmem:[#allocation3 + $0x160] sm:$0xff] %v1233
      %1298 = vst [vmem:[#allocation3 + $0x168] sm:$0xff] %v1234
      %1299 = vst [vmem:[#allocation3 + $0x170] sm:$0xff] %v1235
      %1300 = vst [vmem:[#allocation3 + $0x178] sm:$0xff] %v1236
      %1301 = vst [vmem:[#allocation3 + $0x180] sm:$0xff] %v1237
      %1302 = vst [vmem:[#allocation3 + $0x188] sm:$0xff] %v1238
      %1303 = vst [vmem:[#allocation3 + $0x190] sm:$0xff] %v1239
      %1304 = vst [vmem:[#allocation3 + $0x198] sm:$0xff] %v1240
      %1305 = vst [vmem:[#allocation3 + $0x1a0] sm:$0xff] %v1241
      %1306 = vst [vmem:[#allocation3 + $0x1a8] sm:$0xff] %v1242
      %1307 = vst [vmem:[#allocation3 + $0x1b0] sm:$0xff] %v1243
      %1308 = vst [vmem:[#allocation3 + $0x1b8] sm:$0xff] %v1244
      %1309 = vst [vmem:[#allocation3 + $0x1c0] sm:$0xff] %v1245
      %1310 = vst [vmem:[#allocation3 + $0x1c8] sm:$0xff] %v1246
      %1311 = vst [vmem:[#allocation3 + $0x1d0] sm:$0xff] %v1247
      %1312 = vst [vmem:[#allocation3 + $0x1d8] sm:$0xff] %v1248
      %1313 = vst [vmem:[#allocation3 + $0x1e0] sm:$0xff] %v1249
      %1314 = vst [vmem:[#allocation3 + $0x1e8] sm:$0xff] %v1250
      %1315 = vst [vmem:[#allocation3 + $0x1f0] sm:$0xff] %v1251
      %1316 = vst [vmem:[#allocation3 + $0x1f8] sm:$0xff] %v1252
    $region21: #{tpu_custom_call.1} parent=1 // pred_fallthru
      _
    // Predicated region
    $region22: #{tpu_custom_call.1} parent=1 // pred_check
      _
    $region23: #{tpu_custom_call.1} parent=1 // pred_check_branch
      %1318 = sbr.rel (0) target = $region25
    $region24: #{tpu_custom_call.1} parent=1 // pred_region
      %s1320 = ssub.s32 8192, 8192
      %1321 = vsyncadd [#allocation4], %s1320
      %s1322 = sshll.u32 [#allocation3], 4
      %s1323 = int_to_ptr.vmem [resolvable:$true] %s1322
      %1328 = dma.vmem_to_hbm [thread:$0]  %s1323, 8192, %s3, [#allocation4], 128, 128, 8
    $region25: #{tpu_custom_call.1} parent=1 // pred_fallthru
      _
    // Predicated region
    $region26: #{tpu_custom_call.1} parent=1 // pred_check
      _
    $region27: #{tpu_custom_call.1} parent=1 // pred_check_branch
      %1330 = sbr.rel (0) target = $region29
    $region28: #{tpu_custom_call.1} parent=1 // pred_region
      %1331 = dma.done [#allocation4], 8192
    $region29: #{tpu_custom_call.1} parent=1 // pred_fallthru
      _
    %1332 = vsyncpa [#allocation4], 1

</llo_original>
